<compile_context>
chip_gen: v7x
topology: tpu7x:2x2x1
jax: 0.10.0
libtpu: 0.0.40
codegen_flags: <defaults>
</compile_context>

<pallas_src>
import jax
import jax.numpy as jnp
from jax.experimental import pallas as pl
from jax.experimental.pallas import tpu as pltpu

NEG_SLOPE = 0.01  # torch F.leaky_relu default


def _leaky(v):
    return jnp.where(v >= 0, v, NEG_SLOPE * v)


# ----------------------------- fused kernel -----------------------------
def conv_up_kernel(xe_ref, y_ref, w_ref, b_ref, dw_ref, pwt_ref, pb_ref, o_ref, zp_ref):
    # Per grid step = one batch element; everything below stays in VMEM.
    #   xe_ref : [1, H*W2, 2*Cin]  width-interleaved input pixels (built in wrapper)
    #   y_ref  : [1, H2, W2, C]    skip connection, channels-last
    #   w_ref  : [2, 2*Cin, C]     stage-1 weights, one slab per output-row parity ki
    #   b_ref  : [1, C]            stage-1 bias
    #   dw_ref : [9, C]            depthwise 3x3 weights, row = kh*3 + kw
    #   pwt_ref: [C, C]            pointwise 1x1 weights as [c_out, c_in]
    #   pb_ref : [C, 1]            pointwise bias (column, for planar add)
    #   o_ref  : [1, C, H2*W2]     planar output (free reshape to NCHW in wrapper)
    #   zp_ref : [H2+2, W2+2, C]   VMEM scratch: halo-padded conv2 input
    H2 = zp_ref.shape[0] - 2
    W2 = zp_ref.shape[1] - 2
    C = zp_ref.shape[2]
    H = H2 // 2

    xe = xe_ref[0]                      # [H*W2, 2*Cin]
    b_row = b_ref[...]                  # [1, C]

    # ---- stage 1: ConvTranspose2d(k=2, s=2, p=0) + leaky + skip add ----
    # One matmul per output-row parity ki (K = 2*Cin is tiny; a VPU
    # broadcast-FMA over Cin would also work once the kernel is compute-bound).
    rows = []
    for ki in range(2):
        r = jnp.dot(xe, w_ref[ki], preferred_element_type=jnp.float32)  # [H*W2, C]
        r = _leaky(r + b_row)
        rows.append(r.reshape(H, W2, C)[:, None])                       # [H, 1, W2, C]
    # interleave even/odd output rows along a leading dim (layout-safe)
    z = jnp.concatenate(rows, axis=1).reshape(H2, W2, C)                # [H2, W2, C]
    z = z + y_ref[0]                                                    # ... + y

    # ---- stage 2: depthwise 3x3 (halo in VMEM scratch) + pointwise 1x1 ----
    zp_ref[...] = jnp.zeros_like(zp_ref)        # re-zero halo every step (core-safe)
    zp_ref[1:H2 + 1, 1:W2 + 1, :] = z
    zp = zp_ref[...]                            # [H2+2, W2+2, C]
    dw = dw_ref[...]                            # [9, C]

    acc = jnp.zeros((H2, W2, C), jnp.float32)
    for kh in range(3):                         # depthwise conv = 9 shifted FMAs
        for kw in range(3):
            acc = acc + zp[kh:kh + H2, kw:kw + W2, :] * dw[kh * 3 + kw]
    # NOTE: the shifted windows materialize VMEM copies; pltpu.roll (XLU) could make
    # the W-direction shifts nearly free if this ever becomes the bottleneck.

    # pointwise 1x1 as pw @ acc^T so the result is already channel-planar:
    # the single HBM store is lane-dense (last dim H2*W2) and no output transpose
    # is needed outside the kernel.
    out_t = jax.lax.dot_general(
        pwt_ref[...], acc.reshape(H2 * W2, C),
        (((1,), (1,)), ((), ())),
        preferred_element_type=jnp.float32)     # [C, H2*W2]
    out_t = _leaky(out_t + pb_ref[...])
    o_ref[0] = out_t.astype(o_ref.dtype)


# ------------------------------- wrapper -------------------------------
def conv_up_forward(x, y, params):
    """x: [N, Cin, H, W], y: [N, Cout, 2H, 2W]  (NCHW). Returns [N, Cout, 2H, 2W]."""
    w1, b1, wd, wp, bp = (params["w1"], params["b1"], params["wd"],
                          params["wp"], params["bp"])
    N, Cin, H, W = x.shape
    Cout = w1.shape[1]
    H2, W2 = 2 * H, 2 * W
    P = H2 * W2

    # ---- one-time input prep (tiny tensors / free reshapes, done in XLA) ----
    # Width-interleaved input:  xe[n, i*W2 + 2j+kj, kj*Cin + ci] = x[n, ci, i, j]
    x_nhwc = jnp.transpose(x, (0, 2, 3, 1))                      # [N, H, W, Cin] (small)
    zeros = jnp.zeros_like(x_nhwc)
    xe = jnp.stack([jnp.concatenate([x_nhwc, zeros], axis=-1),   # even w2 columns
                    jnp.concatenate([zeros, x_nhwc], axis=-1)],  # odd  w2 columns
                   axis=3)                                       # [N, H, W, 2, 2Cin]
    xe = xe.reshape(N, H * W2, 2 * Cin)

    # Stage-1 weights grouped by output-row parity ki:
    #   wstack[ki, kj*Cin + ci, co] = w1[ci, co, ki, kj]
    wstack = jnp.transpose(w1, (2, 3, 0, 1)).reshape(2, 2 * Cin, Cout)
    b_row = b1.reshape(1, Cout)

    y_cl = jnp.transpose(y, (0, 2, 3, 1))                        # [N, H2, W2, Cout]

    dw9 = jnp.transpose(wd[:, 0], (1, 2, 0)).reshape(9, Cout)    # [9, C]
    pw_t = wp[:, :, 0, 0]                                        # [Cout(out), Cout(in)]
    pb_col = bp.reshape(Cout, 1)

    out_flat = pl.pallas_call(
        conv_up_kernel,
        out_shape=jax.ShapeDtypeStruct((N, Cout, P), jnp.float32),
        grid=(N,),
        in_specs=[
            pl.BlockSpec((1, H * W2, 2 * Cin), lambda n: (n, 0, 0)),
            pl.BlockSpec((1, H2, W2, Cout), lambda n: (n, 0, 0, 0)),
            pl.BlockSpec((2, 2 * Cin, Cout), lambda n: (0, 0, 0)),
            pl.BlockSpec((1, Cout), lambda n: (0, 0)),
            pl.BlockSpec((9, Cout), lambda n: (0, 0)),
            pl.BlockSpec((Cout, Cout), lambda n: (0, 0)),
            pl.BlockSpec((Cout, 1), lambda n: (0, 0)),
        ],
        out_specs=pl.BlockSpec((1, Cout, P), lambda n: (n, 0, 0)),
        scratch_shapes=[pltpu.VMEM((H2 + 2, W2 + 2, Cout), jnp.float32)],
        compiler_params=pltpu.CompilerParams(
            dimension_semantics=("parallel",),
            # For large images: raise the scoped VMEM limit and/or switch to
            # row-strip tiling (v7x has 64 MiB VMEM per core), e.g.
            # vmem_limit_bytes=64 * 1024 * 1024,
        ),
    )(xe, y_cl, wstack, b_row, dw9, pw_t, pb_col)

    # Output is channel-planar [N, Cout, H2*W2]; NCHW is a free reshape.
    return out_flat.reshape(N, Cout, H2, W2)


# ---------------- pure-JAX reference (torch semantics) ----------------
def conv_up_reference(x, y, params):
    w1, b1, wd, wp, bp = (params["w1"], params["b1"], params["wd"],
                          params["wp"], params["bp"])
    Cout = w1.shape[1]
    dn = ("NCHW", "OIHW", "NCHW")
    # ConvTranspose2d(k=2,s=2,p=0): lhs-dilated conv with flipped, channel-swapped kernel
    w1c = jnp.transpose(w1, (1, 0, 2, 3))[:, :, ::-1, ::-1]
    z = jax.lax.conv_general_dilated(x, w1c, window_strides=(1, 1),
                                     padding=((1, 1), (1, 1)), lhs_dilation=(2, 2),
                                     dimension_numbers=dn)
    z = z + b1[None, :, None, None]
    z = _leaky(z)
    z = z + y
    zd = jax.lax.conv_general_dilated(z, wd, (1, 1), ((1, 1), (1, 1)),
                                      feature_group_count=Cout, dimension_numbers=dn)
    zp = jax.lax.conv_general_dilated(zd, wp, (1, 1), ((0, 0), (0, 0)),
                                      dimension_numbers=dn)
    zp = zp + bp[None, :, None, None]
    return _leaky(zp)


if __name__ == "__main__":
    N, Cin, Cout, H, W = 2, 4, 8, 8, 8
    key = jax.random.PRNGKey(0)
    ks = jax.random.split(key, 8)
    params = {
        "w1": jax.random.normal(ks[0], (Cin, Cout, 2, 2), jnp.float32) * 0.1,  # ConvTranspose2d
        "b1": jax.random.normal(ks[1], (Cout,), jnp.float32) * 0.1,
        "wd": jax.random.normal(ks[2], (Cout, 1, 3, 3), jnp.float32) * 0.1,    # depthwise 3x3
        "wp": jax.random.normal(ks[3], (Cout, Cout, 1, 1), jnp.float32) * 0.1, # pointwise 1x1
        "bp": jax.random.normal(ks[4], (Cout,), jnp.float32) * 0.1,
    }
    x = jax.random.normal(ks[5], (N, Cin, H, W), jnp.float32)
    y = jax.random.normal(ks[6], (N, Cout, 2 * H, 2 * W), jnp.float32)

    out = jax.block_until_ready(conv_up_forward(x, y, params))
    ref = jax.block_until_ready(conv_up_reference(x, y, params))

    assert out.shape == (N, Cout, 2 * H, 2 * W), out.shape
    assert jnp.allclose(out, ref, atol=1e-4, rtol=1e-4), float(jnp.max(jnp.abs(out - ref)))
    print("KERNEL_OK")
</pallas_src>

<mosaic_0001>
module attributes {stable_mosaic.version = 11 : i64} {
  func.func @conv_up_kernel(%arg0: i32, %arg1: memref<1x128x8xf32, #tpu.memory_space<vmem>>, %arg2: memref<1x16x16x8xf32, #tpu.memory_space<vmem>>, %arg3: memref<2x8x8xf32, #tpu.memory_space<vmem>>, %arg4: memref<1x8xf32, #tpu.memory_space<vmem>>, %arg5: memref<9x8xf32, #tpu.memory_space<vmem>>, %arg6: memref<8x8xf32, #tpu.memory_space<vmem>>, %arg7: memref<8x1xf32, #tpu.memory_space<vmem>>, %arg8: memref<1x8x256xf32, #tpu.memory_space<vmem>>, %arg9: memref<18x18x8xf32, #tpu.memory_space<vmem>>) attributes {dimension_semantics = [#tpu.dimension_semantics<parallel>], iteration_bounds = array<i64: 2>, scalar_prefetch = 0 : i64, scratch_operands = 1 : i64, tpu.core_type = #tpu.core_type<tc>, window_params = [{transform_indices = @transform_0, window_bounds = array<i64: 1, 128, 8>}, {transform_indices = @transform_1, window_bounds = array<i64: 1, 16, 16, 8>}, {pipeline_mode = #tpu.pipeline_mode<synchronous>, transform_indices = @transform_2, window_bounds = array<i64: 2, 8, 8>}, {pipeline_mode = #tpu.pipeline_mode<synchronous>, transform_indices = @transform_3, window_bounds = array<i64: 1, 8>}, {pipeline_mode = #tpu.pipeline_mode<synchronous>, transform_indices = @transform_4, window_bounds = array<i64: 9, 8>}, {pipeline_mode = #tpu.pipeline_mode<synchronous>, transform_indices = @transform_5, window_bounds = array<i64: 8, 8>}, {pipeline_mode = #tpu.pipeline_mode<synchronous>, transform_indices = @transform_6, window_bounds = array<i64: 8, 1>}, {transform_indices = @transform_7, window_bounds = array<i64: 1, 8, 256>}]} {
    %c0 = arith.constant 0 : index
    %c0_0 = arith.constant 0 : index
    %c0_1 = arith.constant 0 : index
    %0 = vector.load %arg1[%c0, %c0_0, %c0_1] : memref<1x128x8xf32, #tpu.memory_space<vmem>>, vector<1x128x8xf32>
    %1 = vector.shape_cast %0 : vector<1x128x8xf32> to vector<128x8xf32>
    %c0_2 = arith.constant 0 : index
    %c0_3 = arith.constant 0 : index
    %2 = vector.load %arg4[%c0_2, %c0_3] : memref<1x8xf32, #tpu.memory_space<vmem>>, vector<1x8xf32>
    %c0_4 = arith.constant 0 : index
    %c0_5 = arith.constant 0 : index
    %c0_6 = arith.constant 0 : index
    %3 = vector.load %arg3[%c0_4, %c0_5, %c0_6] : memref<2x8x8xf32, #tpu.memory_space<vmem>>, vector<1x8x8xf32>
    %4 = vector.shape_cast %3 : vector<1x8x8xf32> to vector<8x8xf32>
    %cst = arith.constant dense<0.000000e+00> : vector<128x8xf32>
    %5 = tpu.matmul %1, %4, %cst {dimension_numbers = #tpu.dot_dimension_numbers<[1], [0], [0], [1], [0, 0, 1, 1], [], []>} : vector<128x8xf32>, vector<8x8xf32>, vector<128x8xf32> -> vector<128x8xf32>
    %6 = vector.broadcast %2 : vector<1x8xf32> to vector<128x8xf32>
    %7 = arith.addf %5, %6 : vector<128x8xf32>
    %cst_7 = arith.constant 0.000000e+00 : f32
    %8 = vector.broadcast %cst_7 : f32 to vector<128x8xf32>
    %9 = arith.cmpf oge, %7, %8 : vector<128x8xf32>
    %cst_8 = arith.constant 0.00999999977 : f32
    %10 = vector.broadcast %cst_8 : f32 to vector<128x8xf32>
    %11 = arith.mulf %10, %7 : vector<128x8xf32>
    %12 = arith.select %9, %7, %11 : vector<128x8xi1>, vector<128x8xf32>
    %13 = vector.shape_cast %12 : vector<128x8xf32> to vector<8x16x8xf32>
    %14 = vector.shape_cast %13 : vector<8x16x8xf32> to vector<8x1x16x8xf32>
    %c1 = arith.constant 1 : index
    %c0_9 = arith.constant 0 : index
    %c0_10 = arith.constant 0 : index
    %15 = vector.load %arg3[%c1, %c0_9, %c0_10] : memref<2x8x8xf32, #tpu.memory_space<vmem>>, vector<1x8x8xf32>
    %16 = vector.shape_cast %15 : vector<1x8x8xf32> to vector<8x8xf32>
    %cst_11 = arith.constant dense<0.000000e+00> : vector<128x8xf32>
    %17 = tpu.matmul %1, %16, %cst_11 {dimension_numbers = #tpu.dot_dimension_numbers<[1], [0], [0], [1], [0, 0, 1, 1], [], []>} : vector<128x8xf32>, vector<8x8xf32>, vector<128x8xf32> -> vector<128x8xf32>
    %18 = vector.broadcast %2 : vector<1x8xf32> to vector<128x8xf32>
    %19 = arith.addf %17, %18 : vector<128x8xf32>
    %cst_12 = arith.constant 0.000000e+00 : f32
    %20 = vector.broadcast %cst_12 : f32 to vector<128x8xf32>
    %21 = arith.cmpf oge, %19, %20 : vector<128x8xf32>
    %cst_13 = arith.constant 0.00999999977 : f32
    %22 = vector.broadcast %cst_13 : f32 to vector<128x8xf32>
    %23 = arith.mulf %22, %19 : vector<128x8xf32>
    %24 = arith.select %21, %19, %23 : vector<128x8xi1>, vector<128x8xf32>
    %25 = vector.shape_cast %24 : vector<128x8xf32> to vector<8x16x8xf32>
    %26 = vector.shape_cast %25 : vector<8x16x8xf32> to vector<8x1x16x8xf32>
    %27 = tpu.concatenate %14, %26 in 1 : vector<8x1x16x8xf32>, vector<8x1x16x8xf32> -> vector<8x2x16x8xf32>
    %28 = vector.shape_cast %27 : vector<8x2x16x8xf32> to vector<16x16x8xf32>
    %c0_14 = arith.constant 0 : index
    %c0_15 = arith.constant 0 : index
    %c0_16 = arith.constant 0 : index
    %c0_17 = arith.constant 0 : index
    %29 = vector.load %arg2[%c0_14, %c0_15, %c0_16, %c0_17] : memref<1x16x16x8xf32, #tpu.memory_space<vmem>>, vector<1x16x16x8xf32>
    %30 = vector.shape_cast %29 : vector<1x16x16x8xf32> to vector<16x16x8xf32>
    %31 = arith.addf %28, %30 : vector<16x16x8xf32>
    %cst_18 = arith.constant 0.000000e+00 : f32
    %32 = vector.broadcast %cst_18 : f32 to vector<18x18x8xf32>
    %c0_19 = arith.constant 0 : index
    %c0_20 = arith.constant 0 : index
    %c0_21 = arith.constant 0 : index
    %33 = vector.load %arg9[%c0_19, %c0_20, %c0_21] : memref<18x18x8xf32, #tpu.memory_space<vmem>>, vector<18x18x8xf32>
    tpu.vector_store %arg9[%c0_19, %c0_20, %c0_21], %32 {strides = array<i32>} : memref<18x18x8xf32, #tpu.memory_space<vmem>>, vector<18x18x8xf32>,
    %c1_22 = arith.constant 1 : index
    %c1_23 = arith.constant 1 : index
    %c0_24 = arith.constant 0 : index
    %34 = vector.load %arg9[%c1_22, %c1_23, %c0_24] : memref<18x18x8xf32, #tpu.memory_space<vmem>>, vector<16x16x8xf32>
    tpu.vector_store %arg9[%c1_22, %c1_23, %c0_24], %31 {strides = array<i32>} : memref<18x18x8xf32, #tpu.memory_space<vmem>>, vector<16x16x8xf32>,
    %c0_25 = arith.constant 0 : index
    %c0_26 = arith.constant 0 : index
    %c0_27 = arith.constant 0 : index
    %35 = vector.load %arg9[%c0_25, %c0_26, %c0_27] : memref<18x18x8xf32, #tpu.memory_space<vmem>>, vector<18x18x8xf32>
    %c0_28 = arith.constant 0 : index
    %c0_29 = arith.constant 0 : index
    %36 = vector.load %arg5[%c0_28, %c0_29] : memref<9x8xf32, #tpu.memory_space<vmem>>, vector<9x8xf32>
    %cst_30 = arith.constant 0.000000e+00 : f32
    %37 = vector.broadcast %cst_30 : f32 to vector<16x16x8xf32>
    %38 = vector.extract_strided_slice %35 {offsets = [0, 0, 0], sizes = [16, 16, 8], strides = [1, 1, 1]} : vector<18x18x8xf32> to vector<16x16x8xf32>
    %39 = vector.extract_strided_slice %36 {offsets = [0, 0], sizes = [1, 8], strides = [1, 1]} : vector<9x8xf32> to vector<1x8xf32>
    %40 = vector.shape_cast %39 : vector<1x8xf32> to vector<8xf32>
    %41 = vector.shape_cast %40 : vector<8xf32> to vector<1x1x8xf32>
    %42 = vector.broadcast %41 : vector<1x1x8xf32> to vector<16x16x8xf32>
    %43 = arith.mulf %38, %42 : vector<16x16x8xf32>
    %44 = arith.addf %37, %43 : vector<16x16x8xf32>
    %45 = vector.extract_strided_slice %35 {offsets = [0, 1, 0], sizes = [16, 16, 8], strides = [1, 1, 1]} : vector<18x18x8xf32> to vector<16x16x8xf32>
    %46 = vector.extract_strided_slice %36 {offsets = [1, 0], sizes = [1, 8], strides = [1, 1]} : vector<9x8xf32> to vector<1x8xf32>
    %47 = vector.shape_cast %46 : vector<1x8xf32> to vector<8xf32>
    %48 = vector.shape_cast %47 : vector<8xf32> to vector<1x1x8xf32>
    %49 = vector.broadcast %48 : vector<1x1x8xf32> to vector<16x16x8xf32>
    %50 = arith.mulf %45, %49 : vector<16x16x8xf32>
    %51 = arith.addf %44, %50 : vector<16x16x8xf32>
    %52 = vector.extract_strided_slice %35 {offsets = [0, 2, 0], sizes = [16, 16, 8], strides = [1, 1, 1]} : vector<18x18x8xf32> to vector<16x16x8xf32>
    %53 = vector.extract_strided_slice %36 {offsets = [2, 0], sizes = [1, 8], strides = [1, 1]} : vector<9x8xf32> to vector<1x8xf32>
    %54 = vector.shape_cast %53 : vector<1x8xf32> to vector<8xf32>
    %55 = vector.shape_cast %54 : vector<8xf32> to vector<1x1x8xf32>
    %56 = vector.broadcast %55 : vector<1x1x8xf32> to vector<16x16x8xf32>
    %57 = arith.mulf %52, %56 : vector<16x16x8xf32>
    %58 = arith.addf %51, %57 : vector<16x16x8xf32>
    %59 = vector.extract_strided_slice %35 {offsets = [1, 0, 0], sizes = [16, 16, 8], strides = [1, 1, 1]} : vector<18x18x8xf32> to vector<16x16x8xf32>
    %60 = vector.extract_strided_slice %36 {offsets = [3, 0], sizes = [1, 8], strides = [1, 1]} : vector<9x8xf32> to vector<1x8xf32>
    %61 = vector.shape_cast %60 : vector<1x8xf32> to vector<8xf32>
    %62 = vector.shape_cast %61 : vector<8xf32> to vector<1x1x8xf32>
    %63 = vector.broadcast %62 : vector<1x1x8xf32> to vector<16x16x8xf32>
    %64 = arith.mulf %59, %63 : vector<16x16x8xf32>
    %65 = arith.addf %58, %64 : vector<16x16x8xf32>
    %66 = vector.extract_strided_slice %35 {offsets = [1, 1, 0], sizes = [16, 16, 8], strides = [1, 1, 1]} : vector<18x18x8xf32> to vector<16x16x8xf32>
    %67 = vector.extract_strided_slice %36 {offsets = [4, 0], sizes = [1, 8], strides = [1, 1]} : vector<9x8xf32> to vector<1x8xf32>
    %68 = vector.shape_cast %67 : vector<1x8xf32> to vector<8xf32>
    %69 = vector.shape_cast %68 : vector<8xf32> to vector<1x1x8xf32>
    %70 = vector.broadcast %69 : vector<1x1x8xf32> to vector<16x16x8xf32>
    %71 = arith.mulf %66, %70 : vector<16x16x8xf32>
    %72 = arith.addf %65, %71 : vector<16x16x8xf32>
    %73 = vector.extract_strided_slice %35 {offsets = [1, 2, 0], sizes = [16, 16, 8], strides = [1, 1, 1]} : vector<18x18x8xf32> to vector<16x16x8xf32>
    %74 = vector.extract_strided_slice %36 {offsets = [5, 0], sizes = [1, 8], strides = [1, 1]} : vector<9x8xf32> to vector<1x8xf32>
    %75 = vector.shape_cast %74 : vector<1x8xf32> to vector<8xf32>
    %76 = vector.shape_cast %75 : vector<8xf32> to vector<1x1x8xf32>
    %77 = vector.broadcast %76 : vector<1x1x8xf32> to vector<16x16x8xf32>
    %78 = arith.mulf %73, %77 : vector<16x16x8xf32>
    %79 = arith.addf %72, %78 : vector<16x16x8xf32>
    %80 = vector.extract_strided_slice %35 {offsets = [2, 0, 0], sizes = [16, 16, 8], strides = [1, 1, 1]} : vector<18x18x8xf32> to vector<16x16x8xf32>
    %81 = vector.extract_strided_slice %36 {offsets = [6, 0], sizes = [1, 8], strides = [1, 1]} : vector<9x8xf32> to vector<1x8xf32>
    %82 = vector.shape_cast %81 : vector<1x8xf32> to vector<8xf32>
    %83 = vector.shape_cast %82 : vector<8xf32> to vector<1x1x8xf32>
    %84 = vector.broadcast %83 : vector<1x1x8xf32> to vector<16x16x8xf32>
    %85 = arith.mulf %80, %84 : vector<16x16x8xf32>
    %86 = arith.addf %79, %85 : vector<16x16x8xf32>
    %87 = vector.extract_strided_slice %35 {offsets = [2, 1, 0], sizes = [16, 16, 8], strides = [1, 1, 1]} : vector<18x18x8xf32> to vector<16x16x8xf32>
    %88 = vector.extract_strided_slice %36 {offsets = [7, 0], sizes = [1, 8], strides = [1, 1]} : vector<9x8xf32> to vector<1x8xf32>
    %89 = vector.shape_cast %88 : vector<1x8xf32> to vector<8xf32>
    %90 = vector.shape_cast %89 : vector<8xf32> to vector<1x1x8xf32>
    %91 = vector.broadcast %90 : vector<1x1x8xf32> to vector<16x16x8xf32>
    %92 = arith.mulf %87, %91 : vector<16x16x8xf32>
    %93 = arith.addf %86, %92 : vector<16x16x8xf32>
    %94 = vector.extract_strided_slice %35 {offsets = [2, 2, 0], sizes = [16, 16, 8], strides = [1, 1, 1]} : vector<18x18x8xf32> to vector<16x16x8xf32>
    %95 = vector.extract_strided_slice %36 {offsets = [8, 0], sizes = [1, 8], strides = [1, 1]} : vector<9x8xf32> to vector<1x8xf32>
    %96 = vector.shape_cast %95 : vector<1x8xf32> to vector<8xf32>
    %97 = vector.shape_cast %96 : vector<8xf32> to vector<1x1x8xf32>
    %98 = vector.broadcast %97 : vector<1x1x8xf32> to vector<16x16x8xf32>
    %99 = arith.mulf %94, %98 : vector<16x16x8xf32>
    %100 = arith.addf %93, %99 : vector<16x16x8xf32>
    %c0_31 = arith.constant 0 : index
    %c0_32 = arith.constant 0 : index
    %101 = vector.load %arg6[%c0_31, %c0_32] : memref<8x8xf32, #tpu.memory_space<vmem>>, vector<8x8xf32>
    %102 = vector.shape_cast %100 : vector<16x16x8xf32> to vector<256x8xf32>
    %cst_33 = arith.constant dense<0.000000e+00> : vector<8x256xf32>
    %103 = tpu.matmul %101, %102, %cst_33 {dimension_numbers = #tpu.dot_dimension_numbers<[1], [1], [0], [0], [0, 0, 1, 0], [], []>} : vector<8x8xf32>, vector<256x8xf32>, vector<8x256xf32> -> vector<8x256xf32>
    %c0_34 = arith.constant 0 : index
    %c0_35 = arith.constant 0 : index
    %104 = vector.load %arg7[%c0_34, %c0_35] : memref<8x1xf32, #tpu.memory_space<vmem>>, vector<8x1xf32>
    %105 = vector.broadcast %104 : vector<8x1xf32> to vector<8x256xf32>
    %106 = arith.addf %103, %105 : vector<8x256xf32>
    %cst_36 = arith.constant 0.000000e+00 : f32
    %107 = vector.broadcast %cst_36 : f32 to vector<8x256xf32>
    %108 = arith.cmpf oge, %106, %107 : vector<8x256xf32>
    %cst_37 = arith.constant 0.00999999977 : f32
    %109 = vector.broadcast %cst_37 : f32 to vector<8x256xf32>
    %110 = arith.mulf %109, %106 : vector<8x256xf32>
    %111 = arith.select %108, %106, %110 : vector<8x256xi1>, vector<8x256xf32>
    %c0_38 = arith.constant 0 : index
    %c0_39 = arith.constant 0 : index
    %c0_40 = arith.constant 0 : index
    %112 = vector.load %arg8[%c0_38, %c0_39, %c0_40] : memref<1x8x256xf32, #tpu.memory_space<vmem>>, vector<1x8x256xf32>
    %113 = vector.shape_cast %112 : vector<1x8x256xf32> to vector<8x256xf32>
    %114 = vector.shape_cast %111 : vector<8x256xf32> to vector<1x8x256xf32>
    tpu.vector_store %arg8[%c0_38, %c0_39, %c0_40], %114 {strides = array<i32>} : memref<1x8x256xf32, #tpu.memory_space<vmem>>, vector<1x8x256xf32>,
    return
  }
  func.func @transform_0(%arg0: i32) -> (i32, i32, i32) {
    %c0_i32 = arith.constant 0 : i32
    %c0_i32_0 = arith.constant 0 : i32
    %c0_i32_1 = arith.constant 0 : i32
    return %arg0, %c0_i32, %c0_i32_0 : i32, i32, i32
  }
  func.func @transform_1(%arg0: i32) -> (i32, i32, i32, i32) {
    %c0_i32 = arith.constant 0 : i32
    %c0_i32_0 = arith.constant 0 : i32
    %c0_i32_1 = arith.constant 0 : i32
    %c0_i32_2 = arith.constant 0 : i32
    return %arg0, %c0_i32, %c0_i32_0, %c0_i32_1 : i32, i32, i32, i32
  }
  func.func @transform_2(%arg0: i32) -> (i32, i32, i32) {
    %c0_i32 = arith.constant 0 : i32
    %c0_i32_0 = arith.constant 0 : i32
    %c0_i32_1 = arith.constant 0 : i32
    %c0_i32_2 = arith.constant 0 : i32
    return %c0_i32, %c0_i32_0, %c0_i32_1 : i32, i32, i32
  }
  func.func @transform_3(%arg0: i32) -> (i32, i32) {
    %c0_i32 = arith.constant 0 : i32
    %c0_i32_0 = arith.constant 0 : i32
    %c0_i32_1 = arith.constant 0 : i32
    return %c0_i32, %c0_i32_0 : i32, i32
  }
  func.func @transform_4(%arg0: i32) -> (i32, i32) {
    %c0_i32 = arith.constant 0 : i32
    %c0_i32_0 = arith.constant 0 : i32
    %c0_i32_1 = arith.constant 0 : i32
    return %c0_i32, %c0_i32_0 : i32, i32
  }
  func.func @transform_5(%arg0: i32) -> (i32, i32) {
    %c0_i32 = arith.constant 0 : i32
    %c0_i32_0 = arith.constant 0 : i32
    %c0_i32_1 = arith.constant 0 : i32
    return %c0_i32, %c0_i32_0 : i32, i32
  }
  func.func @transform_6(%arg0: i32) -> (i32, i32) {
    %c0_i32 = arith.constant 0 : i32
    %c0_i32_0 = arith.constant 0 : i32
    %c0_i32_1 = arith.constant 0 : i32
    return %c0_i32, %c0_i32_0 : i32, i32
  }
  func.func @transform_7(%arg0: i32) -> (i32, i32, i32) {
    %c0_i32 = arith.constant 0 : i32
    %c0_i32_0 = arith.constant 0 : i32
    %c0_i32_1 = arith.constant 0 : i32
    return %arg0, %c0_i32, %c0_i32_0 : i32, i32, i32
  }
}

</mosaic_0001>

<llo_original>
// kernel: tpu_custom_call.1
$region0: #{tpu_custom_call.1}
  #allocation0 [shape = 'u32[]', space=smem, size = 0x4, offset = 0x4, fixed_abs, tag = 'smem constant byte address 0x4 - core index']
  #allocation1 [shape = 'u32[144,128]{1,0:T(1,128)}', space=vmem, size = 0x12000, scoped, tag = 'internal scratch']
  #allocation2 [shape = 'f32[18,18,8]{2,1,0:T(8,128)}', space=vmem, size = 0x36000, scoped, tag = 'scratch operand']
  %s0 = inlined_call_operand.vmem [shape: f32[2,128,8], index: 0, kind: input, shape index: {}]
  %s1 = inlined_call_operand.vmem [shape: f32[2,16,16,8], index: 1, kind: input, shape index: {}]
  %s2 = inlined_call_operand.vmem [shape: f32[2,8,8], index: 2, kind: input, shape index: {}]
  %s3 = inlined_call_operand.vmem [shape: f32[1,8], index: 3, kind: input, shape index: {}]
  %s4 = inlined_call_operand.vmem [shape: f32[9,8], index: 4, kind: input, shape index: {}]
  %s5 = inlined_call_operand.vmem [shape: f32[8,8], index: 5, kind: input, shape index: {}]
  %s6 = inlined_call_operand.vmem [shape: f32[8,1], index: 6, kind: input, shape index: {}]
  %s7 = inlined_call_operand.hbm [shape: f32[2,8,256], index: 7, kind: output, shape index: {}]
  %s8 = sld [smem:[#allocation0]]
  $region61: #{tpu_custom_call.1} parent=0
    _
  %s10 = ssub.s32 1, %s8
  %s11 = scalar_select 0, %s10, %s8
  $region1: #{tpu_custom_call.1} parent=0
    #allocation3 [shape = 'u8[16384]{0}', space=vmem, size = 0x4000, scoped, tag = 'output window, operand 0']
    #allocation4 [shape = 's32[2]{0}', space=sflag, size = 0x8, scoped, tag = 'scoped memory for tpu_custom_call.1']
    %12 = vsyncpa [#allocation4], 0
    %s13 = scalar_lea.sflag [#allocation4], 1
    %14 = vsyncpa %s13, 0
    loop: start=0, step=1, limit=4
    $region2: #{tpu_custom_call.1} parent=1 // loop_pre_header
      _
    $region3: #{tpu_custom_call.1} parent=1 // loop_header
      %s16 = sphi 0, %s20
      %p17 = scmp.ge.s32.totalorder %s16, 4
      %s26 = sphi 0, %s28
      %s29 = sphi 0, %s26
      %s30 = sphi 0, %s29
      %s46 = sphi 0, %s30
      %s52 = sphi 0, %s54
      %s55 = sphi 0, %s52
      %s56 = sphi 0, %s55
      %s72 = sphi 0, %s56
      %s76 = sphi 0, %s76
      %s78 = sphi 0, %s76
      %s79 = sphi 0, %s78
      %s93 = sphi 0, %s79
      %s97 = sphi 0, %s97
      %s99 = sphi 0, %s97
      %s100 = sphi 0, %s99
      %s114 = sphi 0, %s100
      %s118 = sphi 0, %s118
      %s120 = sphi 0, %s118
      %s121 = sphi 0, %s120
      %s135 = sphi 0, %s121
      %s139 = sphi 0, %s139
      %s141 = sphi 0, %s139
      %s142 = sphi 0, %s141
      %s156 = sphi 0, %s142
      %s160 = sphi 0, %s160
      %s162 = sphi 0, %s160
      %s163 = sphi 0, %s162
      %s177 = sphi 0, %s163
      %s183 = sphi 0, %s185
      %s186 = sphi 0, %s183
      %s187 = sphi 0, %s186
      %s203 = sphi 0, %s187
    $region4: #{tpu_custom_call.1} parent=1 // loop_header_branch
      %19 = sbr.rel (%p17) target = $region8
    $region5: #{tpu_custom_call.1} parent=1 // loop_body
      %s21 = ssub.s32 %s16, 1
      %s22 = ssub.s32 %s16, 2
      %s23 = sadd.s32 %s16, 1
      %s24 = ssub.s32 %s16, %s23
      %p25 = scmp.eq.s32.totalorder %s24, 0
      %s27 = sadd.s32 %s26, 1
      %s28 = scalar_select %p25, %s26, %s27
      %p31 = pneg %p25
      %p32 = scmp.eq.s32.totalorder %s16, 1
      %p33 = por %p31, %p32
      %p34 = scmp.ne.s32.totalorder %s26, %s29
      %p35 = scmp.eq.s32.totalorder %s16, 0
      %p36 = por %p34, %p35
      %p37 = scmp.ne.s32.totalorder %s26, %s29
      %p38 = scmp.eq.s32.totalorder %s21, 1
      %p39 = por %p37, %p38
      %p40 = scmp.ne.s32.totalorder %s29, %s30
      %p41 = scmp.eq.s32.totalorder %s21, 0
      %p42 = por %p40, %p41
      %p43 = scmp.ne.s32.totalorder %s29, %s30
      %p44 = scmp.eq.s32.totalorder %s22, 1
      %p45 = por %p43, %p44
      %p47 = scmp.ne.s32.totalorder %s30, %s46
      %p48 = scmp.eq.s32.totalorder %s22, 0
      %p49 = por %p47, %p48
      %s50 = ssub.s32 %s16, %s23
      %p51 = scmp.eq.s32.totalorder %s50, 0
      %s53 = sadd.s32 %s52, 1
      %s54 = scalar_select %p51, %s52, %s53
      %p57 = pneg %p51
      %p58 = scmp.eq.s32.totalorder %s16, 1
      %p59 = por %p57, %p58
      %p60 = scmp.ne.s32.totalorder %s52, %s55
      %p61 = scmp.eq.s32.totalorder %s16, 0
      %p62 = por %p60, %p61
      %p63 = scmp.ne.s32.totalorder %s52, %s55
      %p64 = scmp.eq.s32.totalorder %s21, 1
      %p65 = por %p63, %p64
      %p66 = scmp.ne.s32.totalorder %s55, %s56
      %p67 = scmp.eq.s32.totalorder %s21, 0
      %p68 = por %p66, %p67
      %p69 = scmp.ne.s32.totalorder %s55, %s56
      %p70 = scmp.eq.s32.totalorder %s22, 1
      %p71 = por %p69, %p70
      %p73 = scmp.ne.s32.totalorder %s56, %s72
      %p74 = scmp.eq.s32.totalorder %s22, 0
      %p75 = por %p73, %p74
      %s77 = sadd.s32 %s76, 1
      %p80 = scmp.eq.s32.totalorder %s16, 1
      %p81 = scmp.ne.s32.totalorder %s76, %s78
      %p82 = scmp.eq.s32.totalorder %s16, 0
      %p83 = por %p81, %p82
      %p84 = scmp.ne.s32.totalorder %s76, %s78
      %p85 = scmp.eq.s32.totalorder %s21, 1
      %p86 = por %p84, %p85
      %p87 = scmp.ne.s32.totalorder %s78, %s79
      %p88 = scmp.eq.s32.totalorder %s21, 0
      %p89 = por %p87, %p88
      %p90 = scmp.ne.s32.totalorder %s78, %s79
      %p91 = scmp.eq.s32.totalorder %s22, 1
      %p92 = por %p90, %p91
      %p94 = scmp.ne.s32.totalorder %s79, %s93
      %p95 = scmp.eq.s32.totalorder %s22, 0
      %p96 = por %p94, %p95
      %s98 = sadd.s32 %s97, 1
      %p101 = scmp.eq.s32.totalorder %s16, 1
      %p102 = scmp.ne.s32.totalorder %s97, %s99
      %p103 = scmp.eq.s32.totalorder %s16, 0
      %p104 = por %p102, %p103
      %p105 = scmp.ne.s32.totalorder %s97, %s99
      %p106 = scmp.eq.s32.totalorder %s21, 1
      %p107 = por %p105, %p106
      %p108 = scmp.ne.s32.totalorder %s99, %s100
      %p109 = scmp.eq.s32.totalorder %s21, 0
      %p110 = por %p108, %p109
      %p111 = scmp.ne.s32.totalorder %s99, %s100
      %p112 = scmp.eq.s32.totalorder %s22, 1
      %p113 = por %p111, %p112
      %p115 = scmp.ne.s32.totalorder %s100, %s114
      %p116 = scmp.eq.s32.totalorder %s22, 0
      %p117 = por %p115, %p116
      %s119 = sadd.s32 %s118, 1
      %p122 = scmp.eq.s32.totalorder %s16, 1
      %p123 = scmp.ne.s32.totalorder %s118, %s120
      %p124 = scmp.eq.s32.totalorder %s16, 0
      %p125 = por %p123, %p124
      %p126 = scmp.ne.s32.totalorder %s118, %s120
      %p127 = scmp.eq.s32.totalorder %s21, 1
      %p128 = por %p126, %p127
      %p129 = scmp.ne.s32.totalorder %s120, %s121
      %p130 = scmp.eq.s32.totalorder %s21, 0
      %p131 = por %p129, %p130
      %p132 = scmp.ne.s32.totalorder %s120, %s121
      %p133 = scmp.eq.s32.totalorder %s22, 1
      %p134 = por %p132, %p133
      %p136 = scmp.ne.s32.totalorder %s121, %s135
      %p137 = scmp.eq.s32.totalorder %s22, 0
      %p138 = por %p136, %p137
      %s140 = sadd.s32 %s139, 1
      %p143 = scmp.eq.s32.totalorder %s16, 1
      %p144 = scmp.ne.s32.totalorder %s139, %s141
      %p145 = scmp.eq.s32.totalorder %s16, 0
      %p146 = por %p144, %p145
      %p147 = scmp.ne.s32.totalorder %s139, %s141
      %p148 = scmp.eq.s32.totalorder %s21, 1
      %p149 = por %p147, %p148
      %p150 = scmp.ne.s32.totalorder %s141, %s142
      %p151 = scmp.eq.s32.totalorder %s21, 0
      %p152 = por %p150, %p151
      %p153 = scmp.ne.s32.totalorder %s141, %s142
      %p154 = scmp.eq.s32.totalorder %s22, 1
      %p155 = por %p153, %p154
      %p157 = scmp.ne.s32.totalorder %s142, %s156
      %p158 = scmp.eq.s32.totalorder %s22, 0
      %p159 = por %p157, %p158
      %s161 = sadd.s32 %s160, 1
      %p164 = scmp.eq.s32.totalorder %s16, 1
      %p165 = scmp.ne.s32.totalorder %s160, %s162
      %p166 = scmp.eq.s32.totalorder %s16, 0
      %p167 = por %p165, %p166
      %p168 = scmp.ne.s32.totalorder %s160, %s162
      %p169 = scmp.eq.s32.totalorder %s21, 1
      %p170 = por %p168, %p169
      %p171 = scmp.ne.s32.totalorder %s162, %s163
      %p172 = scmp.eq.s32.totalorder %s21, 0
      %p173 = por %p171, %p172
      %p174 = scmp.ne.s32.totalorder %s162, %s163
      %p175 = scmp.eq.s32.totalorder %s22, 1
      %p176 = por %p174, %p175
      %p178 = scmp.ne.s32.totalorder %s163, %s177
      %p179 = scmp.eq.s32.totalorder %s22, 0
      %p180 = por %p178, %p179
      %s181 = ssub.s32 %s16, %s23
      %p182 = scmp.eq.s32.totalorder %s181, 0
      %s184 = sadd.s32 %s183, 1
      %s185 = scalar_select %p182, %s183, %s184
      %p188 = pneg %p182
      %p189 = scmp.eq.s32.totalorder %s16, 1
      %p190 = por %p188, %p189
      %p191 = scmp.ne.s32.totalorder %s183, %s186
      %p192 = scmp.eq.s32.totalorder %s16, 0
      %p193 = por %p191, %p192
      %p194 = scmp.ne.s32.totalorder %s183, %s186
      %p195 = scmp.eq.s32.totalorder %s21, 1
      %p196 = por %p194, %p195
      %p197 = scmp.ne.s32.totalorder %s186, %s187
      %p198 = scmp.eq.s32.totalorder %s21, 0
      %p199 = por %p197, %p198
      %p200 = scmp.ne.s32.totalorder %s186, %s187
      %p201 = scmp.eq.s32.totalorder %s22, 1
      %p202 = por %p200, %p201
      %p204 = scmp.ne.s32.totalorder %s187, %s203
      %p205 = scmp.eq.s32.totalorder %s22, 0
      %p206 = por %p204, %p205
      %p207 = scmp.le.s32.totalorder 1, %s16
      %p208 = scmp.lt.s32.totalorder %s16, 3
      %p209 = pnand %p207, %p208
      %p210 = pneg %p209
      // Predicated region
      $region9: #{tpu_custom_call.1} parent=5 // pred_check
        _
      $region10: #{tpu_custom_call.1} parent=5 // pred_check_branch
        %212 = sbr.rel (%p209) target = $region12
      $region11: #{tpu_custom_call.1} parent=5 // pred_region
        %s213 = ssub.s32 %s16, 1
        // Predicated region
        $region13: #{tpu_custom_call.1} parent=11 // pred_check
          %p214 = pneg %p89
        $region14: #{tpu_custom_call.1} parent=11 // pred_check_branch
          %216 = sbr.rel (%p214) target = $region16
        $region15: #{tpu_custom_call.1} parent=11 // pred_region
          _
        $region16: #{tpu_custom_call.1} parent=11 // pred_fallthru
          _
        // Predicated region
        $region17: #{tpu_custom_call.1} parent=11 // pred_check
          %p217 = pneg %p110
        $region18: #{tpu_custom_call.1} parent=11 // pred_check_branch
          %219 = sbr.rel (%p217) target = $region20
        $region19: #{tpu_custom_call.1} parent=11 // pred_region
          _
        $region20: #{tpu_custom_call.1} parent=11 // pred_fallthru
          _
        // Predicated region
        $region21: #{tpu_custom_call.1} parent=11 // pred_check
          %p220 = pneg %p131
        $region22: #{tpu_custom_call.1} parent=11 // pred_check_branch
          %222 = sbr.rel (%p220) target = $region24
        $region23: #{tpu_custom_call.1} parent=11 // pred_region
          _
        $region24: #{tpu_custom_call.1} parent=11 // pred_fallthru
          _
        // Predicated region
        $region25: #{tpu_custom_call.1} parent=11 // pred_check
          %p223 = pneg %p152
        $region26: #{tpu_custom_call.1} parent=11 // pred_check_branch
          %225 = sbr.rel (%p223) target = $region28
        $region27: #{tpu_custom_call.1} parent=11 // pred_region
          _
        $region28: #{tpu_custom_call.1} parent=11 // pred_fallthru
          _
        // Predicated region
        $region29: #{tpu_custom_call.1} parent=11 // pred_check
          %p226 = pneg %p173
        $region30: #{tpu_custom_call.1} parent=11 // pred_check_branch
          %228 = sbr.rel (%p226) target = $region32
        $region31: #{tpu_custom_call.1} parent=11 // pred_region
          _
        $region32: #{tpu_custom_call.1} parent=11 // pred_fallthru
          _
      $region12: #{tpu_custom_call.1} parent=5 // pred_fallthru
        _
      %p229 = scmp.lt.s32.totalorder %s16, 2
      // Predicated region
      $region33: #{tpu_custom_call.1} parent=5 // pred_check
        %p230 = pneg %p229
      $region34: #{tpu_custom_call.1} parent=5 // pred_check_branch
        %232 = sbr.rel (%p230) target = $region36
      $region35: #{tpu_custom_call.1} parent=5 // pred_region
        // Predicated region
        $region37: #{tpu_custom_call.1} parent=35 // pred_check
          %p233 = pneg %p36
        $region38: #{tpu_custom_call.1} parent=35 // pred_check_branch
          %235 = sbr.rel (%p233) target = $region40
        $region39: #{tpu_custom_call.1} parent=35 // pred_region
          %p236 = scmp.lt.s32.totalorder %s16, 1
          %s237 = scalar_select %p236, %s16, 1
          %s238 = smul.addr %s237, 16
          %s239 = smul.addr %s238, 8
          %s240 = scalar_lea.vmem %s0, %s239
        $region40: #{tpu_custom_call.1} parent=35 // pred_fallthru
          _
        // Predicated region
        $region41: #{tpu_custom_call.1} parent=35 // pred_check
          %p241 = pneg %p62
        $region42: #{tpu_custom_call.1} parent=35 // pred_check_branch
          %243 = sbr.rel (%p241) target = $region44
        $region43: #{tpu_custom_call.1} parent=35 // pred_region
          %p244 = scmp.lt.s32.totalorder %s16, 1
          %s245 = scalar_select %p244, %s16, 1
          %s246 = smul.addr %s245, 32
          %s247 = smul.addr %s246, 8
          %s248 = scalar_lea.vmem %s1, %s247
        $region44: #{tpu_custom_call.1} parent=35 // pred_fallthru
          _
      $region36: #{tpu_custom_call.1} parent=5 // pred_fallthru
        _
      %p249 = scmp.le.s32.totalorder 1, %s16
      %p250 = scmp.lt.s32.totalorder %s16, 3
      %p251 = pnand %p249, %p250
      %p252 = pneg %p251
      // Predicated region
      $region45: #{tpu_custom_call.1} parent=5 // pred_check
        _
      $region46: #{tpu_custom_call.1} parent=5 // pred_check_branch
        %254 = sbr.rel (%p251) target = $region48
      $region47: #{tpu_custom_call.1} parent=5 // pred_region
        %s255 = ssub.s32 %s16, 1
        %p256 = scmp.lt.s32.totalorder %s21, 1
        %s257 = scalar_select %p256, %s21, 1
        %s258 = smul.addr %s257, 16
        %s259 = smul.addr %s258, 8
        %s260 = scalar_lea.vmem %s0, %s259
        %p261 = pneg %p42
        %p262 = pneg %p39
        %p263 = scmp.lt.s32.totalorder %s21, 1
        %s264 = scalar_select %p263, %s21, 1
        %s265 = smul.addr %s264, 32
        %s266 = smul.addr %s265, 8
        %s267 = scalar_lea.vmem %s1, %s266
        %p268 = pneg %p68
        %p269 = pneg %p65
        %p270 = pneg %p89
        %p271 = pneg %p86
        %p272 = pneg %p110
        %p273 = pneg %p107
        %p274 = pneg %p131
        %p275 = pneg %p128
        %p276 = pneg %p152
        %p277 = pneg %p149
        %p278 = pneg %p173
        %p279 = pneg %p170
        %p280 = pneg %p199
        %p281 = pneg %p196
        %s282 = sand.u32 %s186, 1
        %s283 = scalar_lea.sflag [#allocation4], %s282
        %s284 = sand.u32 %s186, 1
        %s285 = smul.addr %s284, 16
        %s286 = scalar_lea.vmem [#allocation3], %s285
        %p287 = scmp.lt.s32.totalorder %s21, 1
        %s288 = scalar_select %p287, %s21, 1
        %s289 = smul.addr %s288, 16
        %s290 = smul.addr %s289, 8
        %s291 = scalar_lea.vmem %s0, %s290
        %p292 = scmp.lt.s32.totalorder %s21, 1
        %s293 = scalar_select %p292, %s21, 1
        %s294 = smul.addr %s293, 32
        %s295 = smul.addr %s294, 8
        %s296 = scalar_lea.vmem %s1, %s295
        %v297 = vld [vmem:[%s291] sm:$0xff]
        %v298 = vld [vmem:[%s291 + $0x8] sm:$0xff]
        %v299 = vld [vmem:[%s291 + $0x10] sm:$0xff]
        %v300 = vld [vmem:[%s291 + $0x18] sm:$0xff]
        %v301 = vld [vmem:[%s291 + $0x20] sm:$0xff]
        %v302 = vld [vmem:[%s291 + $0x28] sm:$0xff]
        %v303 = vld [vmem:[%s291 + $0x30] sm:$0xff]
        %v304 = vld [vmem:[%s291 + $0x38] sm:$0xff]
        %v305 = vld [vmem:[%s291 + $0x40] sm:$0xff]
        %v306 = vld [vmem:[%s291 + $0x48] sm:$0xff]
        %v307 = vld [vmem:[%s291 + $0x50] sm:$0xff]
        %v308 = vld [vmem:[%s291 + $0x58] sm:$0xff]
        %v309 = vld [vmem:[%s291 + $0x60] sm:$0xff]
        %v310 = vld [vmem:[%s291 + $0x68] sm:$0xff]
        %v311 = vld [vmem:[%s291 + $0x70] sm:$0xff]
        %v312 = vld [vmem:[%s291 + $0x78] sm:$0xff]
        %v313 = vld [vmem:[%s3] sm:$0x1]
        %v314 = vld [vmem:[%s2] sm:$0xff]
        %v316 = vlaneseq
        %v317 = vshrl.u32 %v316, 7
        %v318 = vsub.s32 0, %v317
        %v319 = vrot.slane %v313, %v318
        %vm321 = vcmask 64512
        %v323 = vsel %vm321, %v297, 0
        %v326 = vsel %vm321, %v298, 0
        %v329 = vsel %vm321, %v299, 0
        %v332 = vsel %vm321, %v300, 0
        %v335 = vsel %vm321, %v301, 0
        %v338 = vsel %vm321, %v302, 0
        %v341 = vsel %vm321, %v303, 0
        %v344 = vsel %vm321, %v304, 0
        %v347 = vsel %vm321, %v305, 0
        %v350 = vsel %vm321, %v306, 0
        %v353 = vsel %vm321, %v307, 0
        %v356 = vsel %vm321, %v308, 0
        %v359 = vsel %vm321, %v309, 0
        %v362 = vsel %vm321, %v310, 0
        %v365 = vsel %vm321, %v311, 0
        %v368 = vsel %vm321, %v312, 0
        %370 = vmatprep.subr.mxu0 0.0
        %371 = vmatpush1.msra.mxu0 %v314
        %372 = vmatprep.subr.mxu0 0.0
        %373 = vmatpush1.msra.mxu0 0.0
        %374 = vmatprep.subr.mxu0 0.0
        %375 = vmatpush1.msra.mxu0 0.0
        %376 = vmatprep.subr.mxu0 0.0
        %377 = vmatpush1.msra.mxu0 0.0
        %378 = vmatprep.subr.mxu0 0.0
        %379 = vmatpush1.msra.mxu0 0.0
        %380 = vmatprep.subr.mxu0 0.0
        %381 = vmatpush1.msra.mxu0 0.0
        %382 = vmatprep.subr.mxu0 0.0
        %383 = vmatpush1.msra.mxu0 0.0
        %384 = vmatprep.subr.mxu0 0.0
        %385 = vmatpush1.msra.mxu0 0.0
        %386 = vmatprep.subr.mxu0 0.0
        %387 = vmatpush1.msra.mxu0 0.0
        %388 = vmatprep.subr.mxu0 0.0
        %389 = vmatpush1.msra.mxu0 0.0
        %390 = vmatprep.subr.mxu0 0.0
        %391 = vmatpush1.msra.mxu0 0.0
        %392 = vmatprep.subr.mxu0 0.0
        %393 = vmatpush1.msra.mxu0 0.0
        %394 = vmatprep.subr.mxu0 0.0
        %395 = vmatpush1.msra.mxu0 0.0
        %396 = vmatprep.subr.mxu0 0.0
        %397 = vmatpush1.msra.mxu0 0.0
        %398 = vmatprep.subr.mxu0 0.0
        %399 = vmatpush1.msra.mxu0 0.0
        %400 = vmatprep.subr.mxu0 0.0
        %401 = vmatpush1.msra.mxu0 0.0
        %402 = vmatprep.subr.mxu0 0.0
        %403 = vmatpush1.msra.mxu0 0.0
        %404 = vmatprep.subr.mxu0 0.0
        %405 = vmatpush1.msra.mxu0 0.0
        %406 = vmatprep.subr.mxu0 0.0
        %407 = vmatpush1.msra.mxu0 0.0
        %408 = vmatprep.subr.mxu0 0.0
        %409 = vmatpush1.msra.mxu0 0.0
        %410 = vmatprep.subr.mxu0 0.0
        %411 = vmatpush1.msra.mxu0 0.0
        %412 = vmatprep.subr.mxu0 0.0
        %413 = vmatpush1.msra.mxu0 0.0
        %414 = vmatprep.subr.mxu0 0.0
        %415 = vmatpush1.msra.mxu0 0.0
        %416 = vmatprep.subr.mxu0 0.0
        %417 = vmatpush1.msra.mxu0 0.0
        %418 = vmatprep.subr.mxu0 0.0
        %419 = vmatpush1.msra.mxu0 0.0
        %420 = vmatprep.subr.mxu0 0.0
        %421 = vmatpush1.msra.mxu0 0.0
        %422 = vmatprep.subr.mxu0 0.0
        %423 = vmatpush1.msra.mxu0 0.0
        %424 = vmatprep.subr.mxu0 0.0
        %425 = vmatpush1.msra.mxu0 0.0
        %426 = vmatprep.subr.mxu0 0.0
        %427 = vmatpush1.msra.mxu0 0.0
        %428 = vmatprep.subr.mxu0 0.0
        %429 = vmatpush1.msra.mxu0 0.0
        %430 = vmatprep.subr.mxu0 0.0
        %431 = vmatpush1.msra.mxu0 0.0
        %432 = vmatprep.subr.mxu0 0.0
        %433 = vmatpush1.msra.mxu0 0.0
        %434 = vmatprep.mubr.f32.mxu0 0.0
        %435 = vmatmul.mubr.f32.gmra.mrb[0].mxu0 %v323
        %v436 = vpop.f32.mrb[0].mxu0
        %v437 = vadd.f32 %v319, %v436
        %v438 = vpop.f32.mrb[0].mxu0
        %439 = vmatprep.mubr.f32.mxu0 0.0
        %440 = vmatmul.mubr.f32.gmra.mrb[0].mxu0 %v326
        %v441 = vpop.f32.mrb[0].mxu0
        %v442 = vadd.f32 %v319, %v441
        %v443 = vpop.f32.mrb[0].mxu0
        %444 = vmatprep.mubr.f32.mxu0 0.0
        %445 = vmatmul.mubr.f32.gmra.mrb[0].mxu0 %v329
        %v446 = vpop.f32.mrb[0].mxu0
        %v447 = vadd.f32 %v319, %v446
        %v448 = vpop.f32.mrb[0].mxu0
        %449 = vmatprep.mubr.f32.mxu0 0.0
        %450 = vmatmul.mubr.f32.gmra.mrb[0].mxu0 %v332
        %v451 = vpop.f32.mrb[0].mxu0
        %v452 = vadd.f32 %v319, %v451
        %v453 = vpop.f32.mrb[0].mxu0
        %454 = vmatprep.mubr.f32.mxu0 0.0
        %455 = vmatmul.mubr.f32.gmra.mrb[0].mxu0 %v335
        %v456 = vpop.f32.mrb[0].mxu0
        %v457 = vadd.f32 %v319, %v456
        %v458 = vpop.f32.mrb[0].mxu0
        %459 = vmatprep.mubr.f32.mxu0 0.0
        %460 = vmatmul.mubr.f32.gmra.mrb[0].mxu0 %v338
        %v461 = vpop.f32.mrb[0].mxu0
        %v462 = vadd.f32 %v319, %v461
        %v463 = vpop.f32.mrb[0].mxu0
        %464 = vmatprep.mubr.f32.mxu0 0.0
        %465 = vmatmul.mubr.f32.gmra.mrb[0].mxu0 %v341
        %v466 = vpop.f32.mrb[0].mxu0
        %v467 = vadd.f32 %v319, %v466
        %v468 = vpop.f32.mrb[0].mxu0
        %469 = vmatprep.mubr.f32.mxu0 0.0
        %470 = vmatmul.mubr.f32.gmra.mrb[0].mxu0 %v344
        %v471 = vpop.f32.mrb[0].mxu0
        %v472 = vadd.f32 %v319, %v471
        %v473 = vpop.f32.mrb[0].mxu0
        %474 = vmatprep.mubr.f32.mxu0 0.0
        %475 = vmatmul.mubr.f32.gmra.mrb[0].mxu0 %v347
        %v476 = vpop.f32.mrb[0].mxu0
        %v477 = vadd.f32 %v319, %v476
        %v478 = vpop.f32.mrb[0].mxu0
        %479 = vmatprep.mubr.f32.mxu0 0.0
        %480 = vmatmul.mubr.f32.gmra.mrb[0].mxu0 %v350
        %v481 = vpop.f32.mrb[0].mxu0
        %v482 = vadd.f32 %v319, %v481
        %v483 = vpop.f32.mrb[0].mxu0
        %484 = vmatprep.mubr.f32.mxu0 0.0
        %485 = vmatmul.mubr.f32.gmra.mrb[0].mxu0 %v353
        %v486 = vpop.f32.mrb[0].mxu0
        %v487 = vadd.f32 %v319, %v486
        %v488 = vpop.f32.mrb[0].mxu0
        %489 = vmatprep.mubr.f32.mxu0 0.0
        %490 = vmatmul.mubr.f32.gmra.mrb[0].mxu0 %v356
        %v491 = vpop.f32.mrb[0].mxu0
        %v492 = vadd.f32 %v319, %v491
        %v493 = vpop.f32.mrb[0].mxu0
        %494 = vmatprep.mubr.f32.mxu0 0.0
        %495 = vmatmul.mubr.f32.gmra.mrb[0].mxu0 %v359
        %v496 = vpop.f32.mrb[0].mxu0
        %v497 = vadd.f32 %v319, %v496
        %v498 = vpop.f32.mrb[0].mxu0
        %499 = vmatprep.mubr.f32.mxu0 0.0
        %500 = vmatmul.mubr.f32.gmra.mrb[0].mxu0 %v362
        %v501 = vpop.f32.mrb[0].mxu0
        %v502 = vadd.f32 %v319, %v501
        %v503 = vpop.f32.mrb[0].mxu0
        %504 = vmatprep.mubr.f32.mxu0 0.0
        %505 = vmatmul.mubr.f32.gmra.mrb[0].mxu0 %v365
        %v506 = vpop.f32.mrb[0].mxu0
        %v507 = vadd.f32 %v319, %v506
        %v508 = vpop.f32.mrb[0].mxu0
        %509 = vmatprep.mubr.f32.mxu0 0.0
        %510 = vmatmul.mubr.f32.gmra.mrb[0].mxu0 %v368
        %v511 = vpop.f32.mrb[0].mxu0
        %v512 = vadd.f32 %v319, %v511
        %v513 = vpop.f32.mrb[0].mxu0
        %514 = vdwg.mxu0
        %vm515 = vcmp.ge.f32.partialorder %v437, 0.0
        %vm516 = vcmp.ge.f32.partialorder %v442, 0.0
        %vm517 = vcmp.ge.f32.partialorder %v447, 0.0
        %vm518 = vcmp.ge.f32.partialorder %v452, 0.0
        %vm519 = vcmp.ge.f32.partialorder %v457, 0.0
        %vm520 = vcmp.ge.f32.partialorder %v462, 0.0
        %vm521 = vcmp.ge.f32.partialorder %v467, 0.0
        %vm522 = vcmp.ge.f32.partialorder %v472, 0.0
        %vm523 = vcmp.ge.f32.partialorder %v477, 0.0
        %vm524 = vcmp.ge.f32.partialorder %v482, 0.0
        %vm525 = vcmp.ge.f32.partialorder %v487, 0.0
        %vm526 = vcmp.ge.f32.partialorder %v492, 0.0
        %vm527 = vcmp.ge.f32.partialorder %v497, 0.0
        %vm528 = vcmp.ge.f32.partialorder %v502, 0.0
        %vm529 = vcmp.ge.f32.partialorder %v507, 0.0
        %vm530 = vcmp.ge.f32.partialorder %v512, 0.0
        %v531 = vmul.f32 %v437, 0.01
        %v532 = vmul.f32 %v442, 0.01
        %v533 = vmul.f32 %v447, 0.01
        %v534 = vmul.f32 %v452, 0.01
        %v535 = vmul.f32 %v457, 0.01
        %v536 = vmul.f32 %v462, 0.01
        %v537 = vmul.f32 %v467, 0.01
        %v538 = vmul.f32 %v472, 0.01
        %v539 = vmul.f32 %v477, 0.01
        %v540 = vmul.f32 %v482, 0.01
        %v541 = vmul.f32 %v487, 0.01
        %v542 = vmul.f32 %v492, 0.01
        %v543 = vmul.f32 %v497, 0.01
        %v544 = vmul.f32 %v502, 0.01
        %v545 = vmul.f32 %v507, 0.01
        %v546 = vmul.f32 %v512, 0.01
        %v547 = vsel %vm515, %v437, %v531
        %v548 = vsel %vm516, %v442, %v532
        %v549 = vsel %vm517, %v447, %v533
        %v550 = vsel %vm518, %v452, %v534
        %v551 = vsel %vm519, %v457, %v535
        %v552 = vsel %vm520, %v462, %v536
        %v553 = vsel %vm521, %v467, %v537
        %v554 = vsel %vm522, %v472, %v538
        %v555 = vsel %vm523, %v477, %v539
        %v556 = vsel %vm524, %v482, %v540
        %v557 = vsel %vm525, %v487, %v541
        %v558 = vsel %vm526, %v492, %v542
        %v559 = vsel %vm527, %v497, %v543
        %v560 = vsel %vm528, %v502, %v544
        %v561 = vsel %vm529, %v507, %v545
        %v562 = vsel %vm530, %v512, %v546
        %s563 = scalar_lea.vmem %s2, 8
        %v564 = vld [vmem:[%s563] sm:$0xff]
        %565 = vmatprep.subr.mxu0 0.0
        %566 = vmatpush1.msra.mxu0 %v564
        %567 = vmatprep.subr.mxu0 0.0
        %568 = vmatpush1.msra.mxu0 0.0
        %569 = vmatprep.subr.mxu0 0.0
        %570 = vmatpush1.msra.mxu0 0.0
        %571 = vmatprep.subr.mxu0 0.0
        %572 = vmatpush1.msra.mxu0 0.0
        %573 = vmatprep.subr.mxu0 0.0
        %574 = vmatpush1.msra.mxu0 0.0
        %575 = vmatprep.subr.mxu0 0.0
        %576 = vmatpush1.msra.mxu0 0.0
        %577 = vmatprep.subr.mxu0 0.0
        %578 = vmatpush1.msra.mxu0 0.0
        %579 = vmatprep.subr.mxu0 0.0
        %580 = vmatpush1.msra.mxu0 0.0
        %581 = vmatprep.subr.mxu0 0.0
        %582 = vmatpush1.msra.mxu0 0.0
        %583 = vmatprep.subr.mxu0 0.0
        %584 = vmatpush1.msra.mxu0 0.0
        %585 = vmatprep.subr.mxu0 0.0
        %586 = vmatpush1.msra.mxu0 0.0
        %587 = vmatprep.subr.mxu0 0.0
        %588 = vmatpush1.msra.mxu0 0.0
        %589 = vmatprep.subr.mxu0 0.0
        %590 = vmatpush1.msra.mxu0 0.0
        %591 = vmatprep.subr.mxu0 0.0
        %592 = vmatpush1.msra.mxu0 0.0
        %593 = vmatprep.subr.mxu0 0.0
        %594 = vmatpush1.msra.mxu0 0.0
        %595 = vmatprep.subr.mxu0 0.0
        %596 = vmatpush1.msra.mxu0 0.0
        %597 = vmatprep.subr.mxu0 0.0
        %598 = vmatpush1.msra.mxu0 0.0
        %599 = vmatprep.subr.mxu0 0.0
        %600 = vmatpush1.msra.mxu0 0.0
        %601 = vmatprep.subr.mxu0 0.0
        %602 = vmatpush1.msra.mxu0 0.0
        %603 = vmatprep.subr.mxu0 0.0
        %604 = vmatpush1.msra.mxu0 0.0
        %605 = vmatprep.subr.mxu0 0.0
        %606 = vmatpush1.msra.mxu0 0.0
        %607 = vmatprep.subr.mxu0 0.0
        %608 = vmatpush1.msra.mxu0 0.0
        %609 = vmatprep.subr.mxu0 0.0
        %610 = vmatpush1.msra.mxu0 0.0
        %611 = vmatprep.subr.mxu0 0.0
        %612 = vmatpush1.msra.mxu0 0.0
        %613 = vmatprep.subr.mxu0 0.0
        %614 = vmatpush1.msra.mxu0 0.0
        %615 = vmatprep.subr.mxu0 0.0
        %616 = vmatpush1.msra.mxu0 0.0
        %617 = vmatprep.subr.mxu0 0.0
        %618 = vmatpush1.msra.mxu0 0.0
        %619 = vmatprep.subr.mxu0 0.0
        %620 = vmatpush1.msra.mxu0 0.0
        %621 = vmatprep.subr.mxu0 0.0
        %622 = vmatpush1.msra.mxu0 0.0
        %623 = vmatprep.subr.mxu0 0.0
        %624 = vmatpush1.msra.mxu0 0.0
        %625 = vmatprep.subr.mxu0 0.0
        %626 = vmatpush1.msra.mxu0 0.0
        %627 = vmatprep.subr.mxu0 0.0
        %628 = vmatpush1.msra.mxu0 0.0
        %629 = vmatprep.mubr.f32.mxu0 0.0
        %630 = vmatmul.mubr.f32.gmra.mrb[0].mxu0 %v323
        %v631 = vpop.f32.mrb[0].mxu0
        %v632 = vadd.f32 %v319, %v631
        %v633 = vpop.f32.mrb[0].mxu0
        %634 = vmatprep.mubr.f32.mxu0 0.0
        %635 = vmatmul.mubr.f32.gmra.mrb[0].mxu0 %v326
        %v636 = vpop.f32.mrb[0].mxu0
        %v637 = vadd.f32 %v319, %v636
        %v638 = vpop.f32.mrb[0].mxu0
        %639 = vmatprep.mubr.f32.mxu0 0.0
        %640 = vmatmul.mubr.f32.gmra.mrb[0].mxu0 %v329
        %v641 = vpop.f32.mrb[0].mxu0
        %v642 = vadd.f32 %v319, %v641
        %v643 = vpop.f32.mrb[0].mxu0
        %644 = vmatprep.mubr.f32.mxu0 0.0
        %645 = vmatmul.mubr.f32.gmra.mrb[0].mxu0 %v332
        %v646 = vpop.f32.mrb[0].mxu0
        %v647 = vadd.f32 %v319, %v646
        %v648 = vpop.f32.mrb[0].mxu0
        %649 = vmatprep.mubr.f32.mxu0 0.0
        %650 = vmatmul.mubr.f32.gmra.mrb[0].mxu0 %v335
        %v651 = vpop.f32.mrb[0].mxu0
        %v652 = vadd.f32 %v319, %v651
        %v653 = vpop.f32.mrb[0].mxu0
        %654 = vmatprep.mubr.f32.mxu0 0.0
        %655 = vmatmul.mubr.f32.gmra.mrb[0].mxu0 %v338
        %v656 = vpop.f32.mrb[0].mxu0
        %v657 = vadd.f32 %v319, %v656
        %v658 = vpop.f32.mrb[0].mxu0
        %659 = vmatprep.mubr.f32.mxu0 0.0
        %660 = vmatmul.mubr.f32.gmra.mrb[0].mxu0 %v341
        %v661 = vpop.f32.mrb[0].mxu0
        %v662 = vadd.f32 %v319, %v661
        %v663 = vpop.f32.mrb[0].mxu0
        %664 = vmatprep.mubr.f32.mxu0 0.0
        %665 = vmatmul.mubr.f32.gmra.mrb[0].mxu0 %v344
        %v666 = vpop.f32.mrb[0].mxu0
        %v667 = vadd.f32 %v319, %v666
        %v668 = vpop.f32.mrb[0].mxu0
        %669 = vmatprep.mubr.f32.mxu0 0.0
        %670 = vmatmul.mubr.f32.gmra.mrb[0].mxu0 %v347
        %v671 = vpop.f32.mrb[0].mxu0
        %v672 = vadd.f32 %v319, %v671
        %v673 = vpop.f32.mrb[0].mxu0
        %674 = vmatprep.mubr.f32.mxu0 0.0
        %675 = vmatmul.mubr.f32.gmra.mrb[0].mxu0 %v350
        %v676 = vpop.f32.mrb[0].mxu0
        %v677 = vadd.f32 %v319, %v676
        %v678 = vpop.f32.mrb[0].mxu0
        %679 = vmatprep.mubr.f32.mxu0 0.0
        %680 = vmatmul.mubr.f32.gmra.mrb[0].mxu0 %v353
        %v681 = vpop.f32.mrb[0].mxu0
        %v682 = vadd.f32 %v319, %v681
        %v683 = vpop.f32.mrb[0].mxu0
        %684 = vmatprep.mubr.f32.mxu0 0.0
        %685 = vmatmul.mubr.f32.gmra.mrb[0].mxu0 %v356
        %v686 = vpop.f32.mrb[0].mxu0
        %v687 = vadd.f32 %v319, %v686
        %v688 = vpop.f32.mrb[0].mxu0
        %689 = vmatprep.mubr.f32.mxu0 0.0
        %690 = vmatmul.mubr.f32.gmra.mrb[0].mxu0 %v359
        %v691 = vpop.f32.mrb[0].mxu0
        %v692 = vadd.f32 %v319, %v691
        %v693 = vpop.f32.mrb[0].mxu0
        %694 = vmatprep.mubr.f32.mxu0 0.0
        %695 = vmatmul.mubr.f32.gmra.mrb[0].mxu0 %v362
        %v696 = vpop.f32.mrb[0].mxu0
        %v697 = vadd.f32 %v319, %v696
        %v698 = vpop.f32.mrb[0].mxu0
        %699 = vmatprep.mubr.f32.mxu0 0.0
        %700 = vmatmul.mubr.f32.gmra.mrb[0].mxu0 %v365
        %v701 = vpop.f32.mrb[0].mxu0
        %v702 = vadd.f32 %v319, %v701
        %v703 = vpop.f32.mrb[0].mxu0
        %704 = vmatprep.mubr.f32.mxu0 0.0
        %705 = vmatmul.mubr.f32.gmra.mrb[0].mxu0 %v368
        %v706 = vpop.f32.mrb[0].mxu0
        %v707 = vadd.f32 %v319, %v706
        %v708 = vpop.f32.mrb[0].mxu0
        %709 = vdwg.mxu0
        %vm710 = vcmp.ge.f32.partialorder %v632, 0.0
        %vm711 = vcmp.ge.f32.partialorder %v637, 0.0
        %vm712 = vcmp.ge.f32.partialorder %v642, 0.0
        %vm713 = vcmp.ge.f32.partialorder %v647, 0.0
        %vm714 = vcmp.ge.f32.partialorder %v652, 0.0
        %vm715 = vcmp.ge.f32.partialorder %v657, 0.0
        %vm716 = vcmp.ge.f32.partialorder %v662, 0.0
        %vm717 = vcmp.ge.f32.partialorder %v667, 0.0
        %vm718 = vcmp.ge.f32.partialorder %v672, 0.0
        %vm719 = vcmp.ge.f32.partialorder %v677, 0.0
        %vm720 = vcmp.ge.f32.partialorder %v682, 0.0
        %vm721 = vcmp.ge.f32.partialorder %v687, 0.0
        %vm722 = vcmp.ge.f32.partialorder %v692, 0.0
        %vm723 = vcmp.ge.f32.partialorder %v697, 0.0
        %vm724 = vcmp.ge.f32.partialorder %v702, 0.0
        %vm725 = vcmp.ge.f32.partialorder %v707, 0.0
        %v726 = vmul.f32 %v632, 0.01
        %v727 = vmul.f32 %v637, 0.01
        %v728 = vmul.f32 %v642, 0.01
        %v729 = vmul.f32 %v647, 0.01
        %v730 = vmul.f32 %v652, 0.01
        %v731 = vmul.f32 %v657, 0.01
        %v732 = vmul.f32 %v662, 0.01
        %v733 = vmul.f32 %v667, 0.01
        %v734 = vmul.f32 %v672, 0.01
        %v735 = vmul.f32 %v677, 0.01
        %v736 = vmul.f32 %v682, 0.01
        %v737 = vmul.f32 %v687, 0.01
        %v738 = vmul.f32 %v692, 0.01
        %v739 = vmul.f32 %v697, 0.01
        %v740 = vmul.f32 %v702, 0.01
        %v741 = vmul.f32 %v707, 0.01
        %v742 = vsel %vm710, %v632, %v726
        %v743 = vsel %vm711, %v637, %v727
        %v744 = vsel %vm712, %v642, %v728
        %v745 = vsel %vm713, %v647, %v729
        %v746 = vsel %vm714, %v652, %v730
        %v747 = vsel %vm715, %v657, %v731
        %v748 = vsel %vm716, %v662, %v732
        %v749 = vsel %vm717, %v667, %v733
        %v750 = vsel %vm718, %v672, %v734
        %v751 = vsel %vm719, %v677, %v735
        %v752 = vsel %vm720, %v682, %v736
        %v753 = vsel %vm721, %v687, %v737
        %v754 = vsel %vm722, %v692, %v738
        %v755 = vsel %vm723, %v697, %v739
        %v756 = vsel %vm724, %v702, %v740
        %v757 = vsel %vm725, %v707, %v741
        %v758 = vld [vmem:[%s296] sm:$0xff]
        %v759 = vld [vmem:[%s296 + $0x8] sm:$0xff]
        %v760 = vld [vmem:[%s296 + $0x10] sm:$0xff]
        %v761 = vld [vmem:[%s296 + $0x18] sm:$0xff]
        %v762 = vld [vmem:[%s296 + $0x20] sm:$0xff]
        %v763 = vld [vmem:[%s296 + $0x28] sm:$0xff]
        %v764 = vld [vmem:[%s296 + $0x30] sm:$0xff]
        %v765 = vld [vmem:[%s296 + $0x38] sm:$0xff]
        %v766 = vld [vmem:[%s296 + $0x40] sm:$0xff]
        %v767 = vld [vmem:[%s296 + $0x48] sm:$0xff]
        %v768 = vld [vmem:[%s296 + $0x50] sm:$0xff]
        %v769 = vld [vmem:[%s296 + $0x58] sm:$0xff]
        %v770 = vld [vmem:[%s296 + $0x60] sm:$0xff]
        %v771 = vld [vmem:[%s296 + $0x68] sm:$0xff]
        %v772 = vld [vmem:[%s296 + $0x70] sm:$0xff]
        %v773 = vld [vmem:[%s296 + $0x78] sm:$0xff]
        %v774 = vld [vmem:[%s296 + $0x80] sm:$0xff]
        %v775 = vld [vmem:[%s296 + $0x88] sm:$0xff]
        %v776 = vld [vmem:[%s296 + $0x90] sm:$0xff]
        %v777 = vld [vmem:[%s296 + $0x98] sm:$0xff]
        %v778 = vld [vmem:[%s296 + $0xa0] sm:$0xff]
        %v779 = vld [vmem:[%s296 + $0xa8] sm:$0xff]
        %v780 = vld [vmem:[%s296 + $0xb0] sm:$0xff]
        %v781 = vld [vmem:[%s296 + $0xb8] sm:$0xff]
        %v782 = vld [vmem:[%s296 + $0xc0] sm:$0xff]
        %v783 = vld [vmem:[%s296 + $0xc8] sm:$0xff]
        %v784 = vld [vmem:[%s296 + $0xd0] sm:$0xff]
        %v785 = vld [vmem:[%s296 + $0xd8] sm:$0xff]
        %v786 = vld [vmem:[%s296 + $0xe0] sm:$0xff]
        %v787 = vld [vmem:[%s296 + $0xe8] sm:$0xff]
        %v788 = vld [vmem:[%s296 + $0xf0] sm:$0xff]
        %v789 = vld [vmem:[%s296 + $0xf8] sm:$0xff]
        %v790 = vadd.f32 %v547, %v758
        %v791 = vadd.f32 %v548, %v759
        %v792 = vadd.f32 %v742, %v760
        %v793 = vadd.f32 %v743, %v761
        %v794 = vadd.f32 %v549, %v762
        %v795 = vadd.f32 %v550, %v763
        %v796 = vadd.f32 %v744, %v764
        %v797 = vadd.f32 %v745, %v765
        %v798 = vadd.f32 %v551, %v766
        %v799 = vadd.f32 %v552, %v767
        %v800 = vadd.f32 %v746, %v768
        %v801 = vadd.f32 %v747, %v769
        %v802 = vadd.f32 %v553, %v770
        %v803 = vadd.f32 %v554, %v771
        %v804 = vadd.f32 %v748, %v772
        %v805 = vadd.f32 %v749, %v773
        %v806 = vadd.f32 %v555, %v774
        %v807 = vadd.f32 %v556, %v775
        %v808 = vadd.f32 %v750, %v776
        %v809 = vadd.f32 %v751, %v777
        %v810 = vadd.f32 %v557, %v778
        %v811 = vadd.f32 %v558, %v779
        %v812 = vadd.f32 %v752, %v780
        %v813 = vadd.f32 %v753, %v781
        %v814 = vadd.f32 %v559, %v782
        %v815 = vadd.f32 %v560, %v783
        %v816 = vadd.f32 %v754, %v784
        %v817 = vadd.f32 %v755, %v785
        %v818 = vadd.f32 %v561, %v786
        %v819 = vadd.f32 %v562, %v787
        %v820 = vadd.f32 %v756, %v788
        %v821 = vadd.f32 %v757, %v789
        %822 = vst.msk [vmem:[#allocation2] sm:$0xff] %vm321, 0.0
        %823 = vst.msk [vmem:[#allocation2 + $0x8] sm:$0xff] %vm321, 0.0
        %vm824 = vcmask 58368
        %825 = vst.msk [vmem:[#allocation2 + $0x10] sm:$0x3] %vm824, 0.0
        %826 = vst.msk [vmem:[#allocation2 + $0x18] sm:$0xff] %vm321, 0.0
        %827 = vst.msk [vmem:[#allocation2 + $0x20] sm:$0xff] %vm321, 0.0
        %828 = vst.msk [vmem:[#allocation2 + $0x28] sm:$0x3] %vm824, 0.0
        %829 = vst.msk [vmem:[#allocation2 + $0x30] sm:$0xff] %vm321, 0.0
        %830 = vst.msk [vmem:[#allocation2 + $0x38] sm:$0xff] %vm321, 0.0
        %831 = vst.msk [vmem:[#allocation2 + $0x40] sm:$0x3] %vm824, 0.0
        %832 = vst.msk [vmem:[#allocation2 + $0x48] sm:$0xff] %vm321, 0.0
        %833 = vst.msk [vmem:[#allocation2 + $0x50] sm:$0xff] %vm321, 0.0
        %834 = vst.msk [vmem:[#allocation2 + $0x58] sm:$0x3] %vm824, 0.0
        %835 = vst.msk [vmem:[#allocation2 + $0x60] sm:$0xff] %vm321, 0.0
        %836 = vst.msk [vmem:[#allocation2 + $0x68] sm:$0xff] %vm321, 0.0
        %837 = vst.msk [vmem:[#allocation2 + $0x70] sm:$0x3] %vm824, 0.0
        %838 = vst.msk [vmem:[#allocation2 + $0x78] sm:$0xff] %vm321, 0.0
        %839 = vst.msk [vmem:[#allocation2 + $0x80] sm:$0xff] %vm321, 0.0
        %840 = vst.msk [vmem:[#allocation2 + $0x88] sm:$0x3] %vm824, 0.0
        %841 = vst.msk [vmem:[#allocation2 + $0x90] sm:$0xff] %vm321, 0.0
        %842 = vst.msk [vmem:[#allocation2 + $0x98] sm:$0xff] %vm321, 0.0
        %843 = vst.msk [vmem:[#allocation2 + $0xa0] sm:$0x3] %vm824, 0.0
        %844 = vst.msk [vmem:[#allocation2 + $0xa8] sm:$0xff] %vm321, 0.0
        %845 = vst.msk [vmem:[#allocation2 + $0xb0] sm:$0xff] %vm321, 0.0
        %846 = vst.msk [vmem:[#allocation2 + $0xb8] sm:$0x3] %vm824, 0.0
        %847 = vst.msk [vmem:[#allocation2 + $0xc0] sm:$0xff] %vm321, 0.0
        %848 = vst.msk [vmem:[#allocation2 + $0xc8] sm:$0xff] %vm321, 0.0
        %849 = vst.msk [vmem:[#allocation2 + $0xd0] sm:$0x3] %vm824, 0.0
        %850 = vst.msk [vmem:[#allocation2 + $0xd8] sm:$0xff] %vm321, 0.0
        %851 = vst.msk [vmem:[#allocation2 + $0xe0] sm:$0xff] %vm321, 0.0
        %852 = vst.msk [vmem:[#allocation2 + $0xe8] sm:$0x3] %vm824, 0.0
        %853 = vst.msk [vmem:[#allocation2 + $0xf0] sm:$0xff] %vm321, 0.0
        %854 = vst.msk [vmem:[#allocation2 + $0xf8] sm:$0xff] %vm321, 0.0
        %855 = vst.msk [vmem:[#allocation2 + $0x100] sm:$0x3] %vm824, 0.0
        %856 = vst.msk [vmem:[#allocation2 + $0x108] sm:$0xff] %vm321, 0.0
        %857 = vst.msk [vmem:[#allocation2 + $0x110] sm:$0xff] %vm321, 0.0
        %858 = vst.msk [vmem:[#allocation2 + $0x118] sm:$0x3] %vm824, 0.0
        %859 = vst.msk [vmem:[#allocation2 + $0x120] sm:$0xff] %vm321, 0.0
        %860 = vst.msk [vmem:[#allocation2 + $0x128] sm:$0xff] %vm321, 0.0
        %861 = vst.msk [vmem:[#allocation2 + $0x130] sm:$0x3] %vm824, 0.0
        %862 = vst.msk [vmem:[#allocation2 + $0x138] sm:$0xff] %vm321, 0.0
        %863 = vst.msk [vmem:[#allocation2 + $0x140] sm:$0xff] %vm321, 0.0
        %864 = vst.msk [vmem:[#allocation2 + $0x148] sm:$0x3] %vm824, 0.0
        %865 = vst.msk [vmem:[#allocation2 + $0x150] sm:$0xff] %vm321, 0.0
        %866 = vst.msk [vmem:[#allocation2 + $0x158] sm:$0xff] %vm321, 0.0
        %867 = vst.msk [vmem:[#allocation2 + $0x160] sm:$0x3] %vm824, 0.0
        %868 = vst.msk [vmem:[#allocation2 + $0x168] sm:$0xff] %vm321, 0.0
        %869 = vst.msk [vmem:[#allocation2 + $0x170] sm:$0xff] %vm321, 0.0
        %870 = vst.msk [vmem:[#allocation2 + $0x178] sm:$0x3] %vm824, 0.0
        %871 = vst.msk [vmem:[#allocation2 + $0x180] sm:$0xff] %vm321, 0.0
        %872 = vst.msk [vmem:[#allocation2 + $0x188] sm:$0xff] %vm321, 0.0
        %873 = vst.msk [vmem:[#allocation2 + $0x190] sm:$0x3] %vm824, 0.0
        %874 = vst.msk [vmem:[#allocation2 + $0x198] sm:$0xff] %vm321, 0.0
        %875 = vst.msk [vmem:[#allocation2 + $0x1a0] sm:$0xff] %vm321, 0.0
        %876 = vst.msk [vmem:[#allocation2 + $0x1a8] sm:$0x3] %vm824, 0.0
        %s877 = scalar_lea.vmem [#allocation2], 24
        %878 = vst.msk [vmem:[%s877 + $0x1] sm:$0xff] %vm321, %v790
        %879 = vst.msk [vmem:[%s877 + $0x9] sm:$0xff] %vm321, %v791
        %880 = vst.msk [vmem:[%s877 + $0x19] sm:$0xff] %vm321, %v792
        %881 = vst.msk [vmem:[%s877 + $0x21] sm:$0xff] %vm321, %v793
        %882 = vst.msk [vmem:[%s877 + $0x31] sm:$0xff] %vm321, %v794
        %883 = vst.msk [vmem:[%s877 + $0x39] sm:$0xff] %vm321, %v795
        %884 = vst.msk [vmem:[%s877 + $0x49] sm:$0xff] %vm321, %v796
        %885 = vst.msk [vmem:[%s877 + $0x51] sm:$0xff] %vm321, %v797
        %886 = vst.msk [vmem:[%s877 + $0x61] sm:$0xff] %vm321, %v798
        %887 = vst.msk [vmem:[%s877 + $0x69] sm:$0xff] %vm321, %v799
        %888 = vst.msk [vmem:[%s877 + $0x79] sm:$0xff] %vm321, %v800
        %889 = vst.msk [vmem:[%s877 + $0x81] sm:$0xff] %vm321, %v801
        %890 = vst.msk [vmem:[%s877 + $0x91] sm:$0xff] %vm321, %v802
        %891 = vst.msk [vmem:[%s877 + $0x99] sm:$0xff] %vm321, %v803
        %892 = vst.msk [vmem:[%s877 + $0xa9] sm:$0xff] %vm321, %v804
        %893 = vst.msk [vmem:[%s877 + $0xb1] sm:$0xff] %vm321, %v805
        %894 = vst.msk [vmem:[%s877 + $0xc1] sm:$0xff] %vm321, %v806
        %895 = vst.msk [vmem:[%s877 + $0xc9] sm:$0xff] %vm321, %v807
        %896 = vst.msk [vmem:[%s877 + $0xd9] sm:$0xff] %vm321, %v808
        %897 = vst.msk [vmem:[%s877 + $0xe1] sm:$0xff] %vm321, %v809
        %898 = vst.msk [vmem:[%s877 + $0xf1] sm:$0xff] %vm321, %v810
        %899 = vst.msk [vmem:[%s877 + $0xf9] sm:$0xff] %vm321, %v811
        %900 = vst.msk [vmem:[%s877 + $0x109] sm:$0xff] %vm321, %v812
        %901 = vst.msk [vmem:[%s877 + $0x111] sm:$0xff] %vm321, %v813
        %902 = vst.msk [vmem:[%s877 + $0x121] sm:$0xff] %vm321, %v814
        %903 = vst.msk [vmem:[%s877 + $0x129] sm:$0xff] %vm321, %v815
        %904 = vst.msk [vmem:[%s877 + $0x139] sm:$0xff] %vm321, %v816
        %905 = vst.msk [vmem:[%s877 + $0x141] sm:$0xff] %vm321, %v817
        %906 = vst.msk [vmem:[%s877 + $0x151] sm:$0xff] %vm321, %v818
        %907 = vst.msk [vmem:[%s877 + $0x159] sm:$0xff] %vm321, %v819
        %908 = vst.msk [vmem:[%s877 + $0x169] sm:$0xff] %vm321, %v820
        %909 = vst.msk [vmem:[%s877 + $0x171] sm:$0xff] %vm321, %v821
        %v910 = vld [vmem:[#allocation2] sm:$0xff]
        %v911 = vld [vmem:[#allocation2 + $0x8] sm:$0xff]
        %v912 = vld [vmem:[#allocation2 + $0x10] sm:$0x3]
        %v913 = vld [vmem:[#allocation2 + $0x18] sm:$0xff]
        %v914 = vld [vmem:[#allocation2 + $0x20] sm:$0xff]
        %v915 = vld [vmem:[#allocation2 + $0x28] sm:$0x3]
        %v916 = vld [vmem:[#allocation2 + $0x30] sm:$0xff]
        %v917 = vld [vmem:[#allocation2 + $0x38] sm:$0xff]
        %v918 = vld [vmem:[#allocation2 + $0x40] sm:$0x3]
        %v919 = vld [vmem:[#allocation2 + $0x48] sm:$0xff]
        %v920 = vld [vmem:[#allocation2 + $0x50] sm:$0xff]
        %v921 = vld [vmem:[#allocation2 + $0x58] sm:$0x3]
        %v922 = vld [vmem:[#allocation2 + $0x60] sm:$0xff]
        %v923 = vld [vmem:[#allocation2 + $0x68] sm:$0xff]
        %v924 = vld [vmem:[#allocation2 + $0x70] sm:$0x3]
        %v925 = vld [vmem:[#allocation2 + $0x78] sm:$0xff]
        %v926 = vld [vmem:[#allocation2 + $0x80] sm:$0xff]
        %v927 = vld [vmem:[#allocation2 + $0x88] sm:$0x3]
        %v928 = vld [vmem:[#allocation2 + $0x90] sm:$0xff]
        %v929 = vld [vmem:[#allocation2 + $0x98] sm:$0xff]
        %v930 = vld [vmem:[#allocation2 + $0xa0] sm:$0x3]
        %v931 = vld [vmem:[#allocation2 + $0xa8] sm:$0xff]
        %v932 = vld [vmem:[#allocation2 + $0xb0] sm:$0xff]
        %v933 = vld [vmem:[#allocation2 + $0xb8] sm:$0x3]
        %v934 = vld [vmem:[#allocation2 + $0xc0] sm:$0xff]
        %v935 = vld [vmem:[#allocation2 + $0xc8] sm:$0xff]
        %v936 = vld [vmem:[#allocation2 + $0xd0] sm:$0x3]
        %v937 = vld [vmem:[#allocation2 + $0xd8] sm:$0xff]
        %v938 = vld [vmem:[#allocation2 + $0xe0] sm:$0xff]
        %v939 = vld [vmem:[#allocation2 + $0xe8] sm:$0x3]
        %v940 = vld [vmem:[#allocation2 + $0xf0] sm:$0xff]
        %v941 = vld [vmem:[#allocation2 + $0xf8] sm:$0xff]
        %v942 = vld [vmem:[#allocation2 + $0x100] sm:$0x3]
        %v943 = vld [vmem:[#allocation2 + $0x108] sm:$0xff]
        %v944 = vld [vmem:[#allocation2 + $0x110] sm:$0xff]
        %v945 = vld [vmem:[#allocation2 + $0x118] sm:$0x3]
        %v946 = vld [vmem:[#allocation2 + $0x120] sm:$0xff]
        %v947 = vld [vmem:[#allocation2 + $0x128] sm:$0xff]
        %v948 = vld [vmem:[#allocation2 + $0x130] sm:$0x3]
        %v949 = vld [vmem:[#allocation2 + $0x138] sm:$0xff]
        %v950 = vld [vmem:[#allocation2 + $0x140] sm:$0xff]
        %v951 = vld [vmem:[#allocation2 + $0x148] sm:$0x3]
        %v952 = vld [vmem:[#allocation2 + $0x150] sm:$0xff]
        %v953 = vld [vmem:[#allocation2 + $0x158] sm:$0xff]
        %v954 = vld [vmem:[#allocation2 + $0x160] sm:$0x3]
        %v955 = vld [vmem:[#allocation2 + $0x168] sm:$0xff]
        %v956 = vld [vmem:[#allocation2 + $0x170] sm:$0xff]
        %v957 = vld [vmem:[#allocation2 + $0x178] sm:$0x3]
        %v958 = vld [vmem:[#allocation2 + $0x180] sm:$0xff]
        %v959 = vld [vmem:[#allocation2 + $0x188] sm:$0xff]
        %v960 = vld [vmem:[#allocation2 + $0x190] sm:$0x3]
        %v961 = vld [vmem:[#allocation2 + $0x198] sm:$0xff]
        %v962 = vld [vmem:[#allocation2 + $0x1a0] sm:$0xff]
        %v963 = vld [vmem:[#allocation2 + $0x1a8] sm:$0x3]
        %v964 = vld [vmem:[%s4] sm:$0xff]
        %v965 = vld [vmem:[%s4 + $0x8] sm:$0x1]
        %v966 = vlaneseq
        %v967 = vshrl.u32 %v966, 7
        %v968 = vsub.s32 0, %v967
        %v969 = vrot.slane %v964, %v968
        %v970 = vmul.f32 %v910, %v969
        %v971 = vmul.f32 %v911, %v969
        %v972 = vmul.f32 %v913, %v969
        %v973 = vmul.f32 %v914, %v969
        %v974 = vmul.f32 %v916, %v969
        %v975 = vmul.f32 %v917, %v969
        %v976 = vmul.f32 %v919, %v969
        %v977 = vmul.f32 %v920, %v969
        %v978 = vmul.f32 %v922, %v969
        %v979 = vmul.f32 %v923, %v969
        %v980 = vmul.f32 %v925, %v969
        %v981 = vmul.f32 %v926, %v969
        %v982 = vmul.f32 %v928, %v969
        %v983 = vmul.f32 %v929, %v969
        %v984 = vmul.f32 %v931, %v969
        %v985 = vmul.f32 %v932, %v969
        %v986 = vmul.f32 %v934, %v969
        %v987 = vmul.f32 %v935, %v969
        %v988 = vmul.f32 %v937, %v969
        %v989 = vmul.f32 %v938, %v969
        %v990 = vmul.f32 %v940, %v969
        %v991 = vmul.f32 %v941, %v969
        %v992 = vmul.f32 %v943, %v969
        %v993 = vmul.f32 %v944, %v969
        %v994 = vmul.f32 %v946, %v969
        %v995 = vmul.f32 %v947, %v969
        %v996 = vmul.f32 %v949, %v969
        %v997 = vmul.f32 %v950, %v969
        %v998 = vmul.f32 %v952, %v969
        %v999 = vmul.f32 %v953, %v969
        %v1000 = vmul.f32 %v955, %v969
        %v1001 = vmul.f32 %v956, %v969
        %v1002 = vadd.f32 %v970, 0.0
        %v1003 = vadd.f32 %v971, 0.0
        %v1004 = vadd.f32 %v972, 0.0
        %v1005 = vadd.f32 %v973, 0.0
        %v1006 = vadd.f32 %v974, 0.0
        %v1007 = vadd.f32 %v975, 0.0
        %v1008 = vadd.f32 %v976, 0.0
        %v1009 = vadd.f32 %v977, 0.0
        %v1010 = vadd.f32 %v978, 0.0
        %v1011 = vadd.f32 %v979, 0.0
        %v1012 = vadd.f32 %v980, 0.0
        %v1013 = vadd.f32 %v981, 0.0
        %v1014 = vadd.f32 %v982, 0.0
        %v1015 = vadd.f32 %v983, 0.0
        %v1016 = vadd.f32 %v984, 0.0
        %v1017 = vadd.f32 %v985, 0.0
        %v1018 = vadd.f32 %v986, 0.0
        %v1019 = vadd.f32 %v987, 0.0
        %v1020 = vadd.f32 %v988, 0.0
        %v1021 = vadd.f32 %v989, 0.0
        %v1022 = vadd.f32 %v990, 0.0
        %v1023 = vadd.f32 %v991, 0.0
        %v1024 = vadd.f32 %v992, 0.0
        %v1025 = vadd.f32 %v993, 0.0
        %v1026 = vadd.f32 %v994, 0.0
        %v1027 = vadd.f32 %v995, 0.0
        %v1028 = vadd.f32 %v996, 0.0
        %v1029 = vadd.f32 %v997, 0.0
        %v1030 = vadd.f32 %v998, 0.0
        %v1031 = vadd.f32 %v999, 0.0
        %v1032 = vadd.f32 %v1000, 0.0
        %v1033 = vadd.f32 %v1001, 0.0
        %v1034 = vlaneseq
        %v1035 = vshrl.u32 %v1034, 7
        %v1036 = vsub.s32 1, %v1035
        %v1037 = vrot.slane %v964, %v1036
        %v1038 = vmul.f32 %v910, %v1037
        %v1039 = vmul.f32 %v911, %v1037
        %v1040 = vmul.f32 %v912, %v1037
        %v1041 = vmul.f32 %v913, %v1037
        %v1042 = vmul.f32 %v914, %v1037
        %v1043 = vmul.f32 %v915, %v1037
        %v1044 = vmul.f32 %v916, %v1037
        %v1045 = vmul.f32 %v917, %v1037
        %v1046 = vmul.f32 %v918, %v1037
        %v1047 = vmul.f32 %v919, %v1037
        %v1048 = vmul.f32 %v920, %v1037
        %v1049 = vmul.f32 %v921, %v1037
        %v1050 = vmul.f32 %v922, %v1037
        %v1051 = vmul.f32 %v923, %v1037
        %v1052 = vmul.f32 %v924, %v1037
        %v1053 = vmul.f32 %v925, %v1037
        %v1054 = vmul.f32 %v926, %v1037
        %v1055 = vmul.f32 %v927, %v1037
        %v1056 = vmul.f32 %v928, %v1037
        %v1057 = vmul.f32 %v929, %v1037
        %v1058 = vmul.f32 %v930, %v1037
        %v1059 = vmul.f32 %v931, %v1037
        %v1060 = vmul.f32 %v932, %v1037
        %v1061 = vmul.f32 %v933, %v1037
        %v1062 = vmul.f32 %v934, %v1037
        %v1063 = vmul.f32 %v935, %v1037
        %v1064 = vmul.f32 %v936, %v1037
        %v1065 = vmul.f32 %v937, %v1037
        %v1066 = vmul.f32 %v938, %v1037
        %v1067 = vmul.f32 %v939, %v1037
        %v1068 = vmul.f32 %v940, %v1037
        %v1069 = vmul.f32 %v941, %v1037
        %v1070 = vmul.f32 %v942, %v1037
        %v1071 = vmul.f32 %v943, %v1037
        %v1072 = vmul.f32 %v944, %v1037
        %v1073 = vmul.f32 %v945, %v1037
        %v1074 = vmul.f32 %v946, %v1037
        %v1075 = vmul.f32 %v947, %v1037
        %v1076 = vmul.f32 %v948, %v1037
        %v1077 = vmul.f32 %v949, %v1037
        %v1078 = vmul.f32 %v950, %v1037
        %v1079 = vmul.f32 %v951, %v1037
        %v1080 = vmul.f32 %v952, %v1037
        %v1081 = vmul.f32 %v953, %v1037
        %v1082 = vmul.f32 %v954, %v1037
        %v1083 = vmul.f32 %v955, %v1037
        %v1084 = vmul.f32 %v956, %v1037
        %v1085 = vmul.f32 %v957, %v1037
        %vm1134 = vcmask 1046528
        %v1135 = vrot.slane %v1038, 1
        %v1136 = vrot.slane %v1039, 1
        %v1137 = vsel %vm1134, %v1135, %v1136
        %v1138 = vrot.slane %v1040, 1
        %v1139 = vsel %vm1134, %v1136, %v1138
        %v1140 = vrot.slane %v1041, 1
        %v1141 = vrot.slane %v1042, 1
        %v1142 = vsel %vm1134, %v1140, %v1141
        %v1143 = vrot.slane %v1043, 1
        %v1144 = vsel %vm1134, %v1141, %v1143
        %v1145 = vrot.slane %v1044, 1
        %v1146 = vrot.slane %v1045, 1
        %v1147 = vsel %vm1134, %v1145, %v1146
        %v1148 = vrot.slane %v1046, 1
        %v1149 = vsel %vm1134, %v1146, %v1148
        %v1150 = vrot.slane %v1047, 1
        %v1151 = vrot.slane %v1048, 1
        %v1152 = vsel %vm1134, %v1150, %v1151
        %v1153 = vrot.slane %v1049, 1
        %v1154 = vsel %vm1134, %v1151, %v1153
        %v1155 = vrot.slane %v1050, 1
        %v1156 = vrot.slane %v1051, 1
        %v1157 = vsel %vm1134, %v1155, %v1156
        %v1158 = vrot.slane %v1052, 1
        %v1159 = vsel %vm1134, %v1156, %v1158
        %v1160 = vrot.slane %v1053, 1
        %v1161 = vrot.slane %v1054, 1
        %v1162 = vsel %vm1134, %v1160, %v1161
        %v1163 = vrot.slane %v1055, 1
        %v1164 = vsel %vm1134, %v1161, %v1163
        %v1165 = vrot.slane %v1056, 1
        %v1166 = vrot.slane %v1057, 1
        %v1167 = vsel %vm1134, %v1165, %v1166
        %v1168 = vrot.slane %v1058, 1
        %v1169 = vsel %vm1134, %v1166, %v1168
        %v1170 = vrot.slane %v1059, 1
        %v1171 = vrot.slane %v1060, 1
        %v1172 = vsel %vm1134, %v1170, %v1171
        %v1173 = vrot.slane %v1061, 1
        %v1174 = vsel %vm1134, %v1171, %v1173
        %v1175 = vrot.slane %v1062, 1
        %v1176 = vrot.slane %v1063, 1
        %v1177 = vsel %vm1134, %v1175, %v1176
        %v1178 = vrot.slane %v1064, 1
        %v1179 = vsel %vm1134, %v1176, %v1178
        %v1180 = vrot.slane %v1065, 1
        %v1181 = vrot.slane %v1066, 1
        %v1182 = vsel %vm1134, %v1180, %v1181
        %v1183 = vrot.slane %v1067, 1
        %v1184 = vsel %vm1134, %v1181, %v1183
        %v1185 = vrot.slane %v1068, 1
        %v1186 = vrot.slane %v1069, 1
        %v1187 = vsel %vm1134, %v1185, %v1186
        %v1188 = vrot.slane %v1070, 1
        %v1189 = vsel %vm1134, %v1186, %v1188
        %v1190 = vrot.slane %v1071, 1
        %v1191 = vrot.slane %v1072, 1
        %v1192 = vsel %vm1134, %v1190, %v1191
        %v1193 = vrot.slane %v1073, 1
        %v1194 = vsel %vm1134, %v1191, %v1193
        %v1195 = vrot.slane %v1074, 1
        %v1196 = vrot.slane %v1075, 1
        %v1197 = vsel %vm1134, %v1195, %v1196
        %v1198 = vrot.slane %v1076, 1
        %v1199 = vsel %vm1134, %v1196, %v1198
        %v1200 = vrot.slane %v1077, 1
        %v1201 = vrot.slane %v1078, 1
        %v1202 = vsel %vm1134, %v1200, %v1201
        %v1203 = vrot.slane %v1079, 1
        %v1204 = vsel %vm1134, %v1201, %v1203
        %v1205 = vrot.slane %v1080, 1
        %v1206 = vrot.slane %v1081, 1
        %v1207 = vsel %vm1134, %v1205, %v1206
        %v1208 = vrot.slane %v1082, 1
        %v1209 = vsel %vm1134, %v1206, %v1208
        %v1210 = vrot.slane %v1083, 1
        %v1211 = vrot.slane %v1084, 1
        %v1212 = vsel %vm1134, %v1210, %v1211
        %v1213 = vrot.slane %v1085, 1
        %v1214 = vsel %vm1134, %v1211, %v1213
        %v1247 = vadd.f32 %v1002, %v1137
        %v1248 = vadd.f32 %v1003, %v1139
        %v1249 = vadd.f32 %v1004, %v1142
        %v1250 = vadd.f32 %v1005, %v1144
        %v1251 = vadd.f32 %v1006, %v1147
        %v1252 = vadd.f32 %v1007, %v1149
        %v1253 = vadd.f32 %v1008, %v1152
        %v1254 = vadd.f32 %v1009, %v1154
        %v1255 = vadd.f32 %v1010, %v1157
        %v1256 = vadd.f32 %v1011, %v1159
        %v1257 = vadd.f32 %v1012, %v1162
        %v1258 = vadd.f32 %v1013, %v1164
        %v1259 = vadd.f32 %v1014, %v1167
        %v1260 = vadd.f32 %v1015, %v1169
        %v1261 = vadd.f32 %v1016, %v1172
        %v1262 = vadd.f32 %v1017, %v1174
        %v1263 = vadd.f32 %v1018, %v1177
        %v1264 = vadd.f32 %v1019, %v1179
        %v1265 = vadd.f32 %v1020, %v1182
        %v1266 = vadd.f32 %v1021, %v1184
        %v1267 = vadd.f32 %v1022, %v1187
        %v1268 = vadd.f32 %v1023, %v1189
        %v1269 = vadd.f32 %v1024, %v1192
        %v1270 = vadd.f32 %v1025, %v1194
        %v1271 = vadd.f32 %v1026, %v1197
        %v1272 = vadd.f32 %v1027, %v1199
        %v1273 = vadd.f32 %v1028, %v1202
        %v1274 = vadd.f32 %v1029, %v1204
        %v1275 = vadd.f32 %v1030, %v1207
        %v1276 = vadd.f32 %v1031, %v1209
        %v1277 = vadd.f32 %v1032, %v1212
        %v1278 = vadd.f32 %v1033, %v1214
        %v1279 = vlaneseq
        %v1280 = vshrl.u32 %v1279, 7
        %v1281 = vsub.s32 2, %v1280
        %v1282 = vrot.slane %v964, %v1281
        %v1283 = vmul.f32 %v910, %v1282
        %v1284 = vmul.f32 %v911, %v1282
        %v1285 = vmul.f32 %v912, %v1282
        %v1286 = vmul.f32 %v913, %v1282
        %v1287 = vmul.f32 %v914, %v1282
        %v1288 = vmul.f32 %v915, %v1282
        %v1289 = vmul.f32 %v916, %v1282
        %v1290 = vmul.f32 %v917, %v1282
        %v1291 = vmul.f32 %v918, %v1282
        %v1292 = vmul.f32 %v919, %v1282
        %v1293 = vmul.f32 %v920, %v1282
        %v1294 = vmul.f32 %v921, %v1282
        %v1295 = vmul.f32 %v922, %v1282
        %v1296 = vmul.f32 %v923, %v1282
        %v1297 = vmul.f32 %v924, %v1282
        %v1298 = vmul.f32 %v925, %v1282
        %v1299 = vmul.f32 %v926, %v1282
        %v1300 = vmul.f32 %v927, %v1282
        %v1301 = vmul.f32 %v928, %v1282
        %v1302 = vmul.f32 %v929, %v1282
        %v1303 = vmul.f32 %v930, %v1282
        %v1304 = vmul.f32 %v931, %v1282
        %v1305 = vmul.f32 %v932, %v1282
        %v1306 = vmul.f32 %v933, %v1282
        %v1307 = vmul.f32 %v934, %v1282
        %v1308 = vmul.f32 %v935, %v1282
        %v1309 = vmul.f32 %v936, %v1282
        %v1310 = vmul.f32 %v937, %v1282
        %v1311 = vmul.f32 %v938, %v1282
        %v1312 = vmul.f32 %v939, %v1282
        %v1313 = vmul.f32 %v940, %v1282
        %v1314 = vmul.f32 %v941, %v1282
        %v1315 = vmul.f32 %v942, %v1282
        %v1316 = vmul.f32 %v943, %v1282
        %v1317 = vmul.f32 %v944, %v1282
        %v1318 = vmul.f32 %v945, %v1282
        %v1319 = vmul.f32 %v946, %v1282
        %v1320 = vmul.f32 %v947, %v1282
        %v1321 = vmul.f32 %v948, %v1282
        %v1322 = vmul.f32 %v949, %v1282
        %v1323 = vmul.f32 %v950, %v1282
        %v1324 = vmul.f32 %v951, %v1282
        %v1325 = vmul.f32 %v952, %v1282
        %v1326 = vmul.f32 %v953, %v1282
        %v1327 = vmul.f32 %v954, %v1282
        %v1328 = vmul.f32 %v955, %v1282
        %v1329 = vmul.f32 %v956, %v1282
        %v1330 = vmul.f32 %v957, %v1282
        %vm1379 = vcmask 1045504
        %v1380 = vrot.slane %v1283, 2
        %v1381 = vrot.slane %v1284, 2
        %v1382 = vsel %vm1379, %v1380, %v1381
        %v1383 = vrot.slane %v1285, 2
        %v1384 = vsel %vm1379, %v1381, %v1383
        %v1385 = vrot.slane %v1286, 2
        %v1386 = vrot.slane %v1287, 2
        %v1387 = vsel %vm1379, %v1385, %v1386
        %v1388 = vrot.slane %v1288, 2
        %v1389 = vsel %vm1379, %v1386, %v1388
        %v1390 = vrot.slane %v1289, 2
        %v1391 = vrot.slane %v1290, 2
        %v1392 = vsel %vm1379, %v1390, %v1391
        %v1393 = vrot.slane %v1291, 2
        %v1394 = vsel %vm1379, %v1391, %v1393
        %v1395 = vrot.slane %v1292, 2
        %v1396 = vrot.slane %v1293, 2
        %v1397 = vsel %vm1379, %v1395, %v1396
        %v1398 = vrot.slane %v1294, 2
        %v1399 = vsel %vm1379, %v1396, %v1398
        %v1400 = vrot.slane %v1295, 2
        %v1401 = vrot.slane %v1296, 2
        %v1402 = vsel %vm1379, %v1400, %v1401
        %v1403 = vrot.slane %v1297, 2
        %v1404 = vsel %vm1379, %v1401, %v1403
        %v1405 = vrot.slane %v1298, 2
        %v1406 = vrot.slane %v1299, 2
        %v1407 = vsel %vm1379, %v1405, %v1406
        %v1408 = vrot.slane %v1300, 2
        %v1409 = vsel %vm1379, %v1406, %v1408
        %v1410 = vrot.slane %v1301, 2
        %v1411 = vrot.slane %v1302, 2
        %v1412 = vsel %vm1379, %v1410, %v1411
        %v1413 = vrot.slane %v1303, 2
        %v1414 = vsel %vm1379, %v1411, %v1413
        %v1415 = vrot.slane %v1304, 2
        %v1416 = vrot.slane %v1305, 2
        %v1417 = vsel %vm1379, %v1415, %v1416
        %v1418 = vrot.slane %v1306, 2
        %v1419 = vsel %vm1379, %v1416, %v1418
        %v1420 = vrot.slane %v1307, 2
        %v1421 = vrot.slane %v1308, 2
        %v1422 = vsel %vm1379, %v1420, %v1421
        %v1423 = vrot.slane %v1309, 2
        %v1424 = vsel %vm1379, %v1421, %v1423
        %v1425 = vrot.slane %v1310, 2
        %v1426 = vrot.slane %v1311, 2
        %v1427 = vsel %vm1379, %v1425, %v1426
        %v1428 = vrot.slane %v1312, 2
        %v1429 = vsel %vm1379, %v1426, %v1428
        %v1430 = vrot.slane %v1313, 2
        %v1431 = vrot.slane %v1314, 2
        %v1432 = vsel %vm1379, %v1430, %v1431
        %v1433 = vrot.slane %v1315, 2
        %v1434 = vsel %vm1379, %v1431, %v1433
        %v1435 = vrot.slane %v1316, 2
        %v1436 = vrot.slane %v1317, 2
        %v1437 = vsel %vm1379, %v1435, %v1436
        %v1438 = vrot.slane %v1318, 2
        %v1439 = vsel %vm1379, %v1436, %v1438
        %v1440 = vrot.slane %v1319, 2
        %v1441 = vrot.slane %v1320, 2
        %v1442 = vsel %vm1379, %v1440, %v1441
        %v1443 = vrot.slane %v1321, 2
        %v1444 = vsel %vm1379, %v1441, %v1443
        %v1445 = vrot.slane %v1322, 2
        %v1446 = vrot.slane %v1323, 2
        %v1447 = vsel %vm1379, %v1445, %v1446
        %v1448 = vrot.slane %v1324, 2
        %v1449 = vsel %vm1379, %v1446, %v1448
        %v1450 = vrot.slane %v1325, 2
        %v1451 = vrot.slane %v1326, 2
        %v1452 = vsel %vm1379, %v1450, %v1451
        %v1453 = vrot.slane %v1327, 2
        %v1454 = vsel %vm1379, %v1451, %v1453
        %v1455 = vrot.slane %v1328, 2
        %v1456 = vrot.slane %v1329, 2
        %v1457 = vsel %vm1379, %v1455, %v1456
        %v1458 = vrot.slane %v1330, 2
        %v1459 = vsel %vm1379, %v1456, %v1458
        %v1492 = vadd.f32 %v1247, %v1382
        %v1493 = vadd.f32 %v1248, %v1384
        %v1494 = vadd.f32 %v1249, %v1387
        %v1495 = vadd.f32 %v1250, %v1389
        %v1496 = vadd.f32 %v1251, %v1392
        %v1497 = vadd.f32 %v1252, %v1394
        %v1498 = vadd.f32 %v1253, %v1397
        %v1499 = vadd.f32 %v1254, %v1399
        %v1500 = vadd.f32 %v1255, %v1402
        %v1501 = vadd.f32 %v1256, %v1404
        %v1502 = vadd.f32 %v1257, %v1407
        %v1503 = vadd.f32 %v1258, %v1409
        %v1504 = vadd.f32 %v1259, %v1412
        %v1505 = vadd.f32 %v1260, %v1414
        %v1506 = vadd.f32 %v1261, %v1417
        %v1507 = vadd.f32 %v1262, %v1419
        %v1508 = vadd.f32 %v1263, %v1422
        %v1509 = vadd.f32 %v1264, %v1424
        %v1510 = vadd.f32 %v1265, %v1427
        %v1511 = vadd.f32 %v1266, %v1429
        %v1512 = vadd.f32 %v1267, %v1432
        %v1513 = vadd.f32 %v1268, %v1434
        %v1514 = vadd.f32 %v1269, %v1437
        %v1515 = vadd.f32 %v1270, %v1439
        %v1516 = vadd.f32 %v1271, %v1442
        %v1517 = vadd.f32 %v1272, %v1444
        %v1518 = vadd.f32 %v1273, %v1447
        %v1519 = vadd.f32 %v1274, %v1449
        %v1520 = vadd.f32 %v1275, %v1452
        %v1521 = vadd.f32 %v1276, %v1454
        %v1522 = vadd.f32 %v1277, %v1457
        %v1523 = vadd.f32 %v1278, %v1459
        %v1524 = vlaneseq
        %v1525 = vshrl.u32 %v1524, 7
        %v1526 = vsub.s32 3, %v1525
        %v1527 = vrot.slane %v964, %v1526
        %v1528 = vmul.f32 %v913, %v1527
        %v1529 = vmul.f32 %v914, %v1527
        %v1530 = vmul.f32 %v916, %v1527
        %v1531 = vmul.f32 %v917, %v1527
        %v1532 = vmul.f32 %v919, %v1527
        %v1533 = vmul.f32 %v920, %v1527
        %v1534 = vmul.f32 %v922, %v1527
        %v1535 = vmul.f32 %v923, %v1527
        %v1536 = vmul.f32 %v925, %v1527
        %v1537 = vmul.f32 %v926, %v1527
        %v1538 = vmul.f32 %v928, %v1527
        %v1539 = vmul.f32 %v929, %v1527
        %v1540 = vmul.f32 %v931, %v1527
        %v1541 = vmul.f32 %v932, %v1527
        %v1542 = vmul.f32 %v934, %v1527
        %v1543 = vmul.f32 %v935, %v1527
        %v1544 = vmul.f32 %v937, %v1527
        %v1545 = vmul.f32 %v938, %v1527
        %v1546 = vmul.f32 %v940, %v1527
        %v1547 = vmul.f32 %v941, %v1527
        %v1548 = vmul.f32 %v943, %v1527
        %v1549 = vmul.f32 %v944, %v1527
        %v1550 = vmul.f32 %v946, %v1527
        %v1551 = vmul.f32 %v947, %v1527
        %v1552 = vmul.f32 %v949, %v1527
        %v1553 = vmul.f32 %v950, %v1527
        %v1554 = vmul.f32 %v952, %v1527
        %v1555 = vmul.f32 %v953, %v1527
        %v1556 = vmul.f32 %v955, %v1527
        %v1557 = vmul.f32 %v956, %v1527
        %v1558 = vmul.f32 %v958, %v1527
        %v1559 = vmul.f32 %v959, %v1527
        %v1560 = vadd.f32 %v1492, %v1528
        %v1561 = vadd.f32 %v1493, %v1529
        %v1562 = vadd.f32 %v1494, %v1530
        %v1563 = vadd.f32 %v1495, %v1531
        %v1564 = vadd.f32 %v1496, %v1532
        %v1565 = vadd.f32 %v1497, %v1533
        %v1566 = vadd.f32 %v1498, %v1534
        %v1567 = vadd.f32 %v1499, %v1535
        %v1568 = vadd.f32 %v1500, %v1536
        %v1569 = vadd.f32 %v1501, %v1537
        %v1570 = vadd.f32 %v1502, %v1538
        %v1571 = vadd.f32 %v1503, %v1539
        %v1572 = vadd.f32 %v1504, %v1540
        %v1573 = vadd.f32 %v1505, %v1541
        %v1574 = vadd.f32 %v1506, %v1542
        %v1575 = vadd.f32 %v1507, %v1543
        %v1576 = vadd.f32 %v1508, %v1544
        %v1577 = vadd.f32 %v1509, %v1545
        %v1578 = vadd.f32 %v1510, %v1546
        %v1579 = vadd.f32 %v1511, %v1547
        %v1580 = vadd.f32 %v1512, %v1548
        %v1581 = vadd.f32 %v1513, %v1549
        %v1582 = vadd.f32 %v1514, %v1550
        %v1583 = vadd.f32 %v1515, %v1551
        %v1584 = vadd.f32 %v1516, %v1552
        %v1585 = vadd.f32 %v1517, %v1553
        %v1586 = vadd.f32 %v1518, %v1554
        %v1587 = vadd.f32 %v1519, %v1555
        %v1588 = vadd.f32 %v1520, %v1556
        %v1589 = vadd.f32 %v1521, %v1557
        %v1590 = vadd.f32 %v1522, %v1558
        %v1591 = vadd.f32 %v1523, %v1559
        %v1592 = vlaneseq
        %v1593 = vshrl.u32 %v1592, 7
        %v1594 = vsub.s32 4, %v1593
        %v1595 = vrot.slane %v964, %v1594
        %v1596 = vmul.f32 %v913, %v1595
        %v1597 = vmul.f32 %v914, %v1595
        %v1598 = vmul.f32 %v915, %v1595
        %v1599 = vmul.f32 %v916, %v1595
        %v1600 = vmul.f32 %v917, %v1595
        %v1601 = vmul.f32 %v918, %v1595
        %v1602 = vmul.f32 %v919, %v1595
        %v1603 = vmul.f32 %v920, %v1595
        %v1604 = vmul.f32 %v921, %v1595
        %v1605 = vmul.f32 %v922, %v1595
        %v1606 = vmul.f32 %v923, %v1595
        %v1607 = vmul.f32 %v924, %v1595
        %v1608 = vmul.f32 %v925, %v1595
        %v1609 = vmul.f32 %v926, %v1595
        %v1610 = vmul.f32 %v927, %v1595
        %v1611 = vmul.f32 %v928, %v1595
        %v1612 = vmul.f32 %v929, %v1595
        %v1613 = vmul.f32 %v930, %v1595
        %v1614 = vmul.f32 %v931, %v1595
        %v1615 = vmul.f32 %v932, %v1595
        %v1616 = vmul.f32 %v933, %v1595
        %v1617 = vmul.f32 %v934, %v1595
        %v1618 = vmul.f32 %v935, %v1595
        %v1619 = vmul.f32 %v936, %v1595
        %v1620 = vmul.f32 %v937, %v1595
        %v1621 = vmul.f32 %v938, %v1595
        %v1622 = vmul.f32 %v939, %v1595
        %v1623 = vmul.f32 %v940, %v1595
        %v1624 = vmul.f32 %v941, %v1595
        %v1625 = vmul.f32 %v942, %v1595
        %v1626 = vmul.f32 %v943, %v1595
        %v1627 = vmul.f32 %v944, %v1595
        %v1628 = vmul.f32 %v945, %v1595
        %v1629 = vmul.f32 %v946, %v1595
        %v1630 = vmul.f32 %v947, %v1595
        %v1631 = vmul.f32 %v948, %v1595
        %v1632 = vmul.f32 %v949, %v1595
        %v1633 = vmul.f32 %v950, %v1595
        %v1634 = vmul.f32 %v951, %v1595
        %v1635 = vmul.f32 %v952, %v1595
        %v1636 = vmul.f32 %v953, %v1595
        %v1637 = vmul.f32 %v954, %v1595
        %v1638 = vmul.f32 %v955, %v1595
        %v1639 = vmul.f32 %v956, %v1595
        %v1640 = vmul.f32 %v957, %v1595
        %v1641 = vmul.f32 %v958, %v1595
        %v1642 = vmul.f32 %v959, %v1595
        %v1643 = vmul.f32 %v960, %v1595
        %v1692 = vrot.slane %v1596, 1
        %v1693 = vrot.slane %v1597, 1
        %v1694 = vsel %vm1134, %v1692, %v1693
        %v1695 = vrot.slane %v1598, 1
        %v1696 = vsel %vm1134, %v1693, %v1695
        %v1697 = vrot.slane %v1599, 1
        %v1698 = vrot.slane %v1600, 1
        %v1699 = vsel %vm1134, %v1697, %v1698
        %v1700 = vrot.slane %v1601, 1
        %v1701 = vsel %vm1134, %v1698, %v1700
        %v1702 = vrot.slane %v1602, 1
        %v1703 = vrot.slane %v1603, 1
        %v1704 = vsel %vm1134, %v1702, %v1703
        %v1705 = vrot.slane %v1604, 1
        %v1706 = vsel %vm1134, %v1703, %v1705
        %v1707 = vrot.slane %v1605, 1
        %v1708 = vrot.slane %v1606, 1
        %v1709 = vsel %vm1134, %v1707, %v1708
        %v1710 = vrot.slane %v1607, 1
        %v1711 = vsel %vm1134, %v1708, %v1710
        %v1712 = vrot.slane %v1608, 1
        %v1713 = vrot.slane %v1609, 1
        %v1714 = vsel %vm1134, %v1712, %v1713
        %v1715 = vrot.slane %v1610, 1
        %v1716 = vsel %vm1134, %v1713, %v1715
        %v1717 = vrot.slane %v1611, 1
        %v1718 = vrot.slane %v1612, 1
        %v1719 = vsel %vm1134, %v1717, %v1718
        %v1720 = vrot.slane %v1613, 1
        %v1721 = vsel %vm1134, %v1718, %v1720
        %v1722 = vrot.slane %v1614, 1
        %v1723 = vrot.slane %v1615, 1
        %v1724 = vsel %vm1134, %v1722, %v1723
        %v1725 = vrot.slane %v1616, 1
        %v1726 = vsel %vm1134, %v1723, %v1725
        %v1727 = vrot.slane %v1617, 1
        %v1728 = vrot.slane %v1618, 1
        %v1729 = vsel %vm1134, %v1727, %v1728
        %v1730 = vrot.slane %v1619, 1
        %v1731 = vsel %vm1134, %v1728, %v1730
        %v1732 = vrot.slane %v1620, 1
        %v1733 = vrot.slane %v1621, 1
        %v1734 = vsel %vm1134, %v1732, %v1733
        %v1735 = vrot.slane %v1622, 1
        %v1736 = vsel %vm1134, %v1733, %v1735
        %v1737 = vrot.slane %v1623, 1
        %v1738 = vrot.slane %v1624, 1
        %v1739 = vsel %vm1134, %v1737, %v1738
        %v1740 = vrot.slane %v1625, 1
        %v1741 = vsel %vm1134, %v1738, %v1740
        %v1742 = vrot.slane %v1626, 1
        %v1743 = vrot.slane %v1627, 1
        %v1744 = vsel %vm1134, %v1742, %v1743
        %v1745 = vrot.slane %v1628, 1
        %v1746 = vsel %vm1134, %v1743, %v1745
        %v1747 = vrot.slane %v1629, 1
        %v1748 = vrot.slane %v1630, 1
        %v1749 = vsel %vm1134, %v1747, %v1748
        %v1750 = vrot.slane %v1631, 1
        %v1751 = vsel %vm1134, %v1748, %v1750
        %v1752 = vrot.slane %v1632, 1
        %v1753 = vrot.slane %v1633, 1
        %v1754 = vsel %vm1134, %v1752, %v1753
        %v1755 = vrot.slane %v1634, 1
        %v1756 = vsel %vm1134, %v1753, %v1755
        %v1757 = vrot.slane %v1635, 1
        %v1758 = vrot.slane %v1636, 1
        %v1759 = vsel %vm1134, %v1757, %v1758
        %v1760 = vrot.slane %v1637, 1
        %v1761 = vsel %vm1134, %v1758, %v1760
        %v1762 = vrot.slane %v1638, 1
        %v1763 = vrot.slane %v1639, 1
        %v1764 = vsel %vm1134, %v1762, %v1763
        %v1765 = vrot.slane %v1640, 1
        %v1766 = vsel %vm1134, %v1763, %v1765
        %v1767 = vrot.slane %v1641, 1
        %v1768 = vrot.slane %v1642, 1
        %v1769 = vsel %vm1134, %v1767, %v1768
        %v1770 = vrot.slane %v1643, 1
        %v1771 = vsel %vm1134, %v1768, %v1770
        %v1804 = vadd.f32 %v1560, %v1694
        %v1805 = vadd.f32 %v1561, %v1696
        %v1806 = vadd.f32 %v1562, %v1699
        %v1807 = vadd.f32 %v1563, %v1701
        %v1808 = vadd.f32 %v1564, %v1704
        %v1809 = vadd.f32 %v1565, %v1706
        %v1810 = vadd.f32 %v1566, %v1709
        %v1811 = vadd.f32 %v1567, %v1711
        %v1812 = vadd.f32 %v1568, %v1714
        %v1813 = vadd.f32 %v1569, %v1716
        %v1814 = vadd.f32 %v1570, %v1719
        %v1815 = vadd.f32 %v1571, %v1721
        %v1816 = vadd.f32 %v1572, %v1724
        %v1817 = vadd.f32 %v1573, %v1726
        %v1818 = vadd.f32 %v1574, %v1729
        %v1819 = vadd.f32 %v1575, %v1731
        %v1820 = vadd.f32 %v1576, %v1734
        %v1821 = vadd.f32 %v1577, %v1736
        %v1822 = vadd.f32 %v1578, %v1739
        %v1823 = vadd.f32 %v1579, %v1741
        %v1824 = vadd.f32 %v1580, %v1744
        %v1825 = vadd.f32 %v1581, %v1746
        %v1826 = vadd.f32 %v1582, %v1749
        %v1827 = vadd.f32 %v1583, %v1751
        %v1828 = vadd.f32 %v1584, %v1754
        %v1829 = vadd.f32 %v1585, %v1756
        %v1830 = vadd.f32 %v1586, %v1759
        %v1831 = vadd.f32 %v1587, %v1761
        %v1832 = vadd.f32 %v1588, %v1764
        %v1833 = vadd.f32 %v1589, %v1766
        %v1834 = vadd.f32 %v1590, %v1769
        %v1835 = vadd.f32 %v1591, %v1771
        %v1836 = vlaneseq
        %v1837 = vshrl.u32 %v1836, 7
        %v1838 = vsub.s32 5, %v1837
        %v1839 = vrot.slane %v964, %v1838
        %v1840 = vmul.f32 %v913, %v1839
        %v1841 = vmul.f32 %v914, %v1839
        %v1842 = vmul.f32 %v915, %v1839
        %v1843 = vmul.f32 %v916, %v1839
        %v1844 = vmul.f32 %v917, %v1839
        %v1845 = vmul.f32 %v918, %v1839
        %v1846 = vmul.f32 %v919, %v1839
        %v1847 = vmul.f32 %v920, %v1839
        %v1848 = vmul.f32 %v921, %v1839
        %v1849 = vmul.f32 %v922, %v1839
        %v1850 = vmul.f32 %v923, %v1839
        %v1851 = vmul.f32 %v924, %v1839
        %v1852 = vmul.f32 %v925, %v1839
        %v1853 = vmul.f32 %v926, %v1839
        %v1854 = vmul.f32 %v927, %v1839
        %v1855 = vmul.f32 %v928, %v1839
        %v1856 = vmul.f32 %v929, %v1839
        %v1857 = vmul.f32 %v930, %v1839
        %v1858 = vmul.f32 %v931, %v1839
        %v1859 = vmul.f32 %v932, %v1839
        %v1860 = vmul.f32 %v933, %v1839
        %v1861 = vmul.f32 %v934, %v1839
        %v1862 = vmul.f32 %v935, %v1839
        %v1863 = vmul.f32 %v936, %v1839
        %v1864 = vmul.f32 %v937, %v1839
        %v1865 = vmul.f32 %v938, %v1839
        %v1866 = vmul.f32 %v939, %v1839
        %v1867 = vmul.f32 %v940, %v1839
        %v1868 = vmul.f32 %v941, %v1839
        %v1869 = vmul.f32 %v942, %v1839
        %v1870 = vmul.f32 %v943, %v1839
        %v1871 = vmul.f32 %v944, %v1839
        %v1872 = vmul.f32 %v945, %v1839
        %v1873 = vmul.f32 %v946, %v1839
        %v1874 = vmul.f32 %v947, %v1839
        %v1875 = vmul.f32 %v948, %v1839
        %v1876 = vmul.f32 %v949, %v1839
        %v1877 = vmul.f32 %v950, %v1839
        %v1878 = vmul.f32 %v951, %v1839
        %v1879 = vmul.f32 %v952, %v1839
        %v1880 = vmul.f32 %v953, %v1839
        %v1881 = vmul.f32 %v954, %v1839
        %v1882 = vmul.f32 %v955, %v1839
        %v1883 = vmul.f32 %v956, %v1839
        %v1884 = vmul.f32 %v957, %v1839
        %v1885 = vmul.f32 %v958, %v1839
        %v1886 = vmul.f32 %v959, %v1839
        %v1887 = vmul.f32 %v960, %v1839
        %v1936 = vrot.slane %v1840, 2
        %v1937 = vrot.slane %v1841, 2
        %v1938 = vsel %vm1379, %v1936, %v1937
        %v1939 = vrot.slane %v1842, 2
        %v1940 = vsel %vm1379, %v1937, %v1939
        %v1941 = vrot.slane %v1843, 2
        %v1942 = vrot.slane %v1844, 2
        %v1943 = vsel %vm1379, %v1941, %v1942
        %v1944 = vrot.slane %v1845, 2
        %v1945 = vsel %vm1379, %v1942, %v1944
        %v1946 = vrot.slane %v1846, 2
        %v1947 = vrot.slane %v1847, 2
        %v1948 = vsel %vm1379, %v1946, %v1947
        %v1949 = vrot.slane %v1848, 2
        %v1950 = vsel %vm1379, %v1947, %v1949
        %v1951 = vrot.slane %v1849, 2
        %v1952 = vrot.slane %v1850, 2
        %v1953 = vsel %vm1379, %v1951, %v1952
        %v1954 = vrot.slane %v1851, 2
        %v1955 = vsel %vm1379, %v1952, %v1954
        %v1956 = vrot.slane %v1852, 2
        %v1957 = vrot.slane %v1853, 2
        %v1958 = vsel %vm1379, %v1956, %v1957
        %v1959 = vrot.slane %v1854, 2
        %v1960 = vsel %vm1379, %v1957, %v1959
        %v1961 = vrot.slane %v1855, 2
        %v1962 = vrot.slane %v1856, 2
        %v1963 = vsel %vm1379, %v1961, %v1962
        %v1964 = vrot.slane %v1857, 2
        %v1965 = vsel %vm1379, %v1962, %v1964
        %v1966 = vrot.slane %v1858, 2
        %v1967 = vrot.slane %v1859, 2
        %v1968 = vsel %vm1379, %v1966, %v1967
        %v1969 = vrot.slane %v1860, 2
        %v1970 = vsel %vm1379, %v1967, %v1969
        %v1971 = vrot.slane %v1861, 2
        %v1972 = vrot.slane %v1862, 2
        %v1973 = vsel %vm1379, %v1971, %v1972
        %v1974 = vrot.slane %v1863, 2
        %v1975 = vsel %vm1379, %v1972, %v1974
        %v1976 = vrot.slane %v1864, 2
        %v1977 = vrot.slane %v1865, 2
        %v1978 = vsel %vm1379, %v1976, %v1977
        %v1979 = vrot.slane %v1866, 2
        %v1980 = vsel %vm1379, %v1977, %v1979
        %v1981 = vrot.slane %v1867, 2
        %v1982 = vrot.slane %v1868, 2
        %v1983 = vsel %vm1379, %v1981, %v1982
        %v1984 = vrot.slane %v1869, 2
        %v1985 = vsel %vm1379, %v1982, %v1984
        %v1986 = vrot.slane %v1870, 2
        %v1987 = vrot.slane %v1871, 2
        %v1988 = vsel %vm1379, %v1986, %v1987
        %v1989 = vrot.slane %v1872, 2
        %v1990 = vsel %vm1379, %v1987, %v1989
        %v1991 = vrot.slane %v1873, 2
        %v1992 = vrot.slane %v1874, 2
        %v1993 = vsel %vm1379, %v1991, %v1992
        %v1994 = vrot.slane %v1875, 2
        %v1995 = vsel %vm1379, %v1992, %v1994
        %v1996 = vrot.slane %v1876, 2
        %v1997 = vrot.slane %v1877, 2
        %v1998 = vsel %vm1379, %v1996, %v1997
        %v1999 = vrot.slane %v1878, 2
        %v2000 = vsel %vm1379, %v1997, %v1999
        %v2001 = vrot.slane %v1879, 2
        %v2002 = vrot.slane %v1880, 2
        %v2003 = vsel %vm1379, %v2001, %v2002
        %v2004 = vrot.slane %v1881, 2
        %v2005 = vsel %vm1379, %v2002, %v2004
        %v2006 = vrot.slane %v1882, 2
        %v2007 = vrot.slane %v1883, 2
        %v2008 = vsel %vm1379, %v2006, %v2007
        %v2009 = vrot.slane %v1884, 2
        %v2010 = vsel %vm1379, %v2007, %v2009
        %v2011 = vrot.slane %v1885, 2
        %v2012 = vrot.slane %v1886, 2
        %v2013 = vsel %vm1379, %v2011, %v2012
        %v2014 = vrot.slane %v1887, 2
        %v2015 = vsel %vm1379, %v2012, %v2014
        %v2048 = vadd.f32 %v1804, %v1938
        %v2049 = vadd.f32 %v1805, %v1940
        %v2050 = vadd.f32 %v1806, %v1943
        %v2051 = vadd.f32 %v1807, %v1945
        %v2052 = vadd.f32 %v1808, %v1948
        %v2053 = vadd.f32 %v1809, %v1950
        %v2054 = vadd.f32 %v1810, %v1953
        %v2055 = vadd.f32 %v1811, %v1955
        %v2056 = vadd.f32 %v1812, %v1958
        %v2057 = vadd.f32 %v1813, %v1960
        %v2058 = vadd.f32 %v1814, %v1963
        %v2059 = vadd.f32 %v1815, %v1965
        %v2060 = vadd.f32 %v1816, %v1968
        %v2061 = vadd.f32 %v1817, %v1970
        %v2062 = vadd.f32 %v1818, %v1973
        %v2063 = vadd.f32 %v1819, %v1975
        %v2064 = vadd.f32 %v1820, %v1978
        %v2065 = vadd.f32 %v1821, %v1980
        %v2066 = vadd.f32 %v1822, %v1983
        %v2067 = vadd.f32 %v1823, %v1985
        %v2068 = vadd.f32 %v1824, %v1988
        %v2069 = vadd.f32 %v1825, %v1990
        %v2070 = vadd.f32 %v1826, %v1993
        %v2071 = vadd.f32 %v1827, %v1995
        %v2072 = vadd.f32 %v1828, %v1998
        %v2073 = vadd.f32 %v1829, %v2000
        %v2074 = vadd.f32 %v1830, %v2003
        %v2075 = vadd.f32 %v1831, %v2005
        %v2076 = vadd.f32 %v1832, %v2008
        %v2077 = vadd.f32 %v1833, %v2010
        %v2078 = vadd.f32 %v1834, %v2013
        %v2079 = vadd.f32 %v1835, %v2015
        %v2080 = vlaneseq
        %v2081 = vshrl.u32 %v2080, 7
        %v2082 = vsub.s32 6, %v2081
        %v2083 = vrot.slane %v964, %v2082
        %v2084 = vmul.f32 %v916, %v2083
        %v2085 = vmul.f32 %v917, %v2083
        %v2086 = vmul.f32 %v919, %v2083
        %v2087 = vmul.f32 %v920, %v2083
        %v2088 = vmul.f32 %v922, %v2083
        %v2089 = vmul.f32 %v923, %v2083
        %v2090 = vmul.f32 %v925, %v2083
        %v2091 = vmul.f32 %v926, %v2083
        %v2092 = vmul.f32 %v928, %v2083
        %v2093 = vmul.f32 %v929, %v2083
        %v2094 = vmul.f32 %v931, %v2083
        %v2095 = vmul.f32 %v932, %v2083
        %v2096 = vmul.f32 %v934, %v2083
        %v2097 = vmul.f32 %v935, %v2083
        %v2098 = vmul.f32 %v937, %v2083
        %v2099 = vmul.f32 %v938, %v2083
        %v2100 = vmul.f32 %v940, %v2083
        %v2101 = vmul.f32 %v941, %v2083
        %v2102 = vmul.f32 %v943, %v2083
        %v2103 = vmul.f32 %v944, %v2083
        %v2104 = vmul.f32 %v946, %v2083
        %v2105 = vmul.f32 %v947, %v2083
        %v2106 = vmul.f32 %v949, %v2083
        %v2107 = vmul.f32 %v950, %v2083
        %v2108 = vmul.f32 %v952, %v2083
        %v2109 = vmul.f32 %v953, %v2083
        %v2110 = vmul.f32 %v955, %v2083
        %v2111 = vmul.f32 %v956, %v2083
        %v2112 = vmul.f32 %v958, %v2083
        %v2113 = vmul.f32 %v959, %v2083
        %v2114 = vmul.f32 %v961, %v2083
        %v2115 = vmul.f32 %v962, %v2083
        %v2116 = vadd.f32 %v2048, %v2084
        %v2117 = vadd.f32 %v2049, %v2085
        %v2118 = vadd.f32 %v2050, %v2086
        %v2119 = vadd.f32 %v2051, %v2087
        %v2120 = vadd.f32 %v2052, %v2088
        %v2121 = vadd.f32 %v2053, %v2089
        %v2122 = vadd.f32 %v2054, %v2090
        %v2123 = vadd.f32 %v2055, %v2091
        %v2124 = vadd.f32 %v2056, %v2092
        %v2125 = vadd.f32 %v2057, %v2093
        %v2126 = vadd.f32 %v2058, %v2094
        %v2127 = vadd.f32 %v2059, %v2095
        %v2128 = vadd.f32 %v2060, %v2096
        %v2129 = vadd.f32 %v2061, %v2097
        %v2130 = vadd.f32 %v2062, %v2098
        %v2131 = vadd.f32 %v2063, %v2099
        %v2132 = vadd.f32 %v2064, %v2100
        %v2133 = vadd.f32 %v2065, %v2101
        %v2134 = vadd.f32 %v2066, %v2102
        %v2135 = vadd.f32 %v2067, %v2103
        %v2136 = vadd.f32 %v2068, %v2104
        %v2137 = vadd.f32 %v2069, %v2105
        %v2138 = vadd.f32 %v2070, %v2106
        %v2139 = vadd.f32 %v2071, %v2107
        %v2140 = vadd.f32 %v2072, %v2108
        %v2141 = vadd.f32 %v2073, %v2109
        %v2142 = vadd.f32 %v2074, %v2110
        %v2143 = vadd.f32 %v2075, %v2111
        %v2144 = vadd.f32 %v2076, %v2112
        %v2145 = vadd.f32 %v2077, %v2113
        %v2146 = vadd.f32 %v2078, %v2114
        %v2147 = vadd.f32 %v2079, %v2115
        %v2148 = vlaneseq
        %v2149 = vshrl.u32 %v2148, 7
        %v2150 = vsub.s32 7, %v2149
        %v2151 = vrot.slane %v964, %v2150
        %v2152 = vmul.f32 %v916, %v2151
        %v2153 = vmul.f32 %v917, %v2151
        %v2154 = vmul.f32 %v918, %v2151
        %v2155 = vmul.f32 %v919, %v2151
        %v2156 = vmul.f32 %v920, %v2151
        %v2157 = vmul.f32 %v921, %v2151
        %v2158 = vmul.f32 %v922, %v2151
        %v2159 = vmul.f32 %v923, %v2151
        %v2160 = vmul.f32 %v924, %v2151
        %v2161 = vmul.f32 %v925, %v2151
        %v2162 = vmul.f32 %v926, %v2151
        %v2163 = vmul.f32 %v927, %v2151
        %v2164 = vmul.f32 %v928, %v2151
        %v2165 = vmul.f32 %v929, %v2151
        %v2166 = vmul.f32 %v930, %v2151
        %v2167 = vmul.f32 %v931, %v2151
        %v2168 = vmul.f32 %v932, %v2151
        %v2169 = vmul.f32 %v933, %v2151
        %v2170 = vmul.f32 %v934, %v2151
        %v2171 = vmul.f32 %v935, %v2151
        %v2172 = vmul.f32 %v936, %v2151
        %v2173 = vmul.f32 %v937, %v2151
        %v2174 = vmul.f32 %v938, %v2151
        %v2175 = vmul.f32 %v939, %v2151
        %v2176 = vmul.f32 %v940, %v2151
        %v2177 = vmul.f32 %v941, %v2151
        %v2178 = vmul.f32 %v942, %v2151
        %v2179 = vmul.f32 %v943, %v2151
        %v2180 = vmul.f32 %v944, %v2151
        %v2181 = vmul.f32 %v945, %v2151
        %v2182 = vmul.f32 %v946, %v2151
        %v2183 = vmul.f32 %v947, %v2151
        %v2184 = vmul.f32 %v948, %v2151
        %v2185 = vmul.f32 %v949, %v2151
        %v2186 = vmul.f32 %v950, %v2151
        %v2187 = vmul.f32 %v951, %v2151
        %v2188 = vmul.f32 %v952, %v2151
        %v2189 = vmul.f32 %v953, %v2151
        %v2190 = vmul.f32 %v954, %v2151
        %v2191 = vmul.f32 %v955, %v2151
        %v2192 = vmul.f32 %v956, %v2151
        %v2193 = vmul.f32 %v957, %v2151
        %v2194 = vmul.f32 %v958, %v2151
        %v2195 = vmul.f32 %v959, %v2151
        %v2196 = vmul.f32 %v960, %v2151
        %v2197 = vmul.f32 %v961, %v2151
        %v2198 = vmul.f32 %v962, %v2151
        %v2199 = vmul.f32 %v963, %v2151
        %v2248 = vrot.slane %v2152, 1
        %v2249 = vrot.slane %v2153, 1
        %v2250 = vsel %vm1134, %v2248, %v2249
        %v2251 = vrot.slane %v2154, 1
        %v2252 = vsel %vm1134, %v2249, %v2251
        %v2253 = vrot.slane %v2155, 1
        %v2254 = vrot.slane %v2156, 1
        %v2255 = vsel %vm1134, %v2253, %v2254
        %v2256 = vrot.slane %v2157, 1
        %v2257 = vsel %vm1134, %v2254, %v2256
        %v2258 = vrot.slane %v2158, 1
        %v2259 = vrot.slane %v2159, 1
        %v2260 = vsel %vm1134, %v2258, %v2259
        %v2261 = vrot.slane %v2160, 1
        %v2262 = vsel %vm1134, %v2259, %v2261
        %v2263 = vrot.slane %v2161, 1
        %v2264 = vrot.slane %v2162, 1
        %v2265 = vsel %vm1134, %v2263, %v2264
        %v2266 = vrot.slane %v2163, 1
        %v2267 = vsel %vm1134, %v2264, %v2266
        %v2268 = vrot.slane %v2164, 1
        %v2269 = vrot.slane %v2165, 1
        %v2270 = vsel %vm1134, %v2268, %v2269
        %v2271 = vrot.slane %v2166, 1
        %v2272 = vsel %vm1134, %v2269, %v2271
        %v2273 = vrot.slane %v2167, 1
        %v2274 = vrot.slane %v2168, 1
        %v2275 = vsel %vm1134, %v2273, %v2274
        %v2276 = vrot.slane %v2169, 1
        %v2277 = vsel %vm1134, %v2274, %v2276
        %v2278 = vrot.slane %v2170, 1
        %v2279 = vrot.slane %v2171, 1
        %v2280 = vsel %vm1134, %v2278, %v2279
        %v2281 = vrot.slane %v2172, 1
        %v2282 = vsel %vm1134, %v2279, %v2281
        %v2283 = vrot.slane %v2173, 1
        %v2284 = vrot.slane %v2174, 1
        %v2285 = vsel %vm1134, %v2283, %v2284
        %v2286 = vrot.slane %v2175, 1
        %v2287 = vsel %vm1134, %v2284, %v2286
        %v2288 = vrot.slane %v2176, 1
        %v2289 = vrot.slane %v2177, 1
        %v2290 = vsel %vm1134, %v2288, %v2289
        %v2291 = vrot.slane %v2178, 1
        %v2292 = vsel %vm1134, %v2289, %v2291
        %v2293 = vrot.slane %v2179, 1
        %v2294 = vrot.slane %v2180, 1
        %v2295 = vsel %vm1134, %v2293, %v2294
        %v2296 = vrot.slane %v2181, 1
        %v2297 = vsel %vm1134, %v2294, %v2296
        %v2298 = vrot.slane %v2182, 1
        %v2299 = vrot.slane %v2183, 1
        %v2300 = vsel %vm1134, %v2298, %v2299
        %v2301 = vrot.slane %v2184, 1
        %v2302 = vsel %vm1134, %v2299, %v2301
        %v2303 = vrot.slane %v2185, 1
        %v2304 = vrot.slane %v2186, 1
        %v2305 = vsel %vm1134, %v2303, %v2304
        %v2306 = vrot.slane %v2187, 1
        %v2307 = vsel %vm1134, %v2304, %v2306
        %v2308 = vrot.slane %v2188, 1
        %v2309 = vrot.slane %v2189, 1
        %v2310 = vsel %vm1134, %v2308, %v2309
        %v2311 = vrot.slane %v2190, 1
        %v2312 = vsel %vm1134, %v2309, %v2311
        %v2313 = vrot.slane %v2191, 1
        %v2314 = vrot.slane %v2192, 1
        %v2315 = vsel %vm1134, %v2313, %v2314
        %v2316 = vrot.slane %v2193, 1
        %v2317 = vsel %vm1134, %v2314, %v2316
        %v2318 = vrot.slane %v2194, 1
        %v2319 = vrot.slane %v2195, 1
        %v2320 = vsel %vm1134, %v2318, %v2319
        %v2321 = vrot.slane %v2196, 1
        %v2322 = vsel %vm1134, %v2319, %v2321
        %v2323 = vrot.slane %v2197, 1
        %v2324 = vrot.slane %v2198, 1
        %v2325 = vsel %vm1134, %v2323, %v2324
        %v2326 = vrot.slane %v2199, 1
        %v2327 = vsel %vm1134, %v2324, %v2326
        %v2360 = vadd.f32 %v2116, %v2250
        %v2361 = vadd.f32 %v2117, %v2252
        %v2362 = vadd.f32 %v2118, %v2255
        %v2363 = vadd.f32 %v2119, %v2257
        %v2364 = vadd.f32 %v2120, %v2260
        %v2365 = vadd.f32 %v2121, %v2262
        %v2366 = vadd.f32 %v2122, %v2265
        %v2367 = vadd.f32 %v2123, %v2267
        %v2368 = vadd.f32 %v2124, %v2270
        %v2369 = vadd.f32 %v2125, %v2272
        %v2370 = vadd.f32 %v2126, %v2275
        %v2371 = vadd.f32 %v2127, %v2277
        %v2372 = vadd.f32 %v2128, %v2280
        %v2373 = vadd.f32 %v2129, %v2282
        %v2374 = vadd.f32 %v2130, %v2285
        %v2375 = vadd.f32 %v2131, %v2287
        %v2376 = vadd.f32 %v2132, %v2290
        %v2377 = vadd.f32 %v2133, %v2292
        %v2378 = vadd.f32 %v2134, %v2295
        %v2379 = vadd.f32 %v2135, %v2297
        %v2380 = vadd.f32 %v2136, %v2300
        %v2381 = vadd.f32 %v2137, %v2302
        %v2382 = vadd.f32 %v2138, %v2305
        %v2383 = vadd.f32 %v2139, %v2307
        %v2384 = vadd.f32 %v2140, %v2310
        %v2385 = vadd.f32 %v2141, %v2312
        %v2386 = vadd.f32 %v2142, %v2315
        %v2387 = vadd.f32 %v2143, %v2317
        %v2388 = vadd.f32 %v2144, %v2320
        %v2389 = vadd.f32 %v2145, %v2322
        %v2390 = vadd.f32 %v2146, %v2325
        %v2391 = vadd.f32 %v2147, %v2327
        %v2392 = vlaneseq
        %v2393 = vshrl.u32 %v2392, 7
        %v2394 = vsub.s32 0, %v2393
        %v2395 = vrot.slane %v965, %v2394
        %v2396 = vmul.f32 %v916, %v2395
        %v2397 = vmul.f32 %v917, %v2395
        %v2398 = vmul.f32 %v918, %v2395
        %v2399 = vmul.f32 %v919, %v2395
        %v2400 = vmul.f32 %v920, %v2395
        %v2401 = vmul.f32 %v921, %v2395
        %v2402 = vmul.f32 %v922, %v2395
        %v2403 = vmul.f32 %v923, %v2395
        %v2404 = vmul.f32 %v924, %v2395
        %v2405 = vmul.f32 %v925, %v2395
        %v2406 = vmul.f32 %v926, %v2395
        %v2407 = vmul.f32 %v927, %v2395
        %v2408 = vmul.f32 %v928, %v2395
        %v2409 = vmul.f32 %v929, %v2395
        %v2410 = vmul.f32 %v930, %v2395
        %v2411 = vmul.f32 %v931, %v2395
        %v2412 = vmul.f32 %v932, %v2395
        %v2413 = vmul.f32 %v933, %v2395
        %v2414 = vmul.f32 %v934, %v2395
        %v2415 = vmul.f32 %v935, %v2395
        %v2416 = vmul.f32 %v936, %v2395
        %v2417 = vmul.f32 %v937, %v2395
        %v2418 = vmul.f32 %v938, %v2395
        %v2419 = vmul.f32 %v939, %v2395
        %v2420 = vmul.f32 %v940, %v2395
        %v2421 = vmul.f32 %v941, %v2395
        %v2422 = vmul.f32 %v942, %v2395
        %v2423 = vmul.f32 %v943, %v2395
        %v2424 = vmul.f32 %v944, %v2395
        %v2425 = vmul.f32 %v945, %v2395
        %v2426 = vmul.f32 %v946, %v2395
        %v2427 = vmul.f32 %v947, %v2395
        %v2428 = vmul.f32 %v948, %v2395
        %v2429 = vmul.f32 %v949, %v2395
        %v2430 = vmul.f32 %v950, %v2395
        %v2431 = vmul.f32 %v951, %v2395
        %v2432 = vmul.f32 %v952, %v2395
        %v2433 = vmul.f32 %v953, %v2395
        %v2434 = vmul.f32 %v954, %v2395
        %v2435 = vmul.f32 %v955, %v2395
        %v2436 = vmul.f32 %v956, %v2395
        %v2437 = vmul.f32 %v957, %v2395
        %v2438 = vmul.f32 %v958, %v2395
        %v2439 = vmul.f32 %v959, %v2395
        %v2440 = vmul.f32 %v960, %v2395
        %v2441 = vmul.f32 %v961, %v2395
        %v2442 = vmul.f32 %v962, %v2395
        %v2443 = vmul.f32 %v963, %v2395
        %v2492 = vrot.slane %v2396, 2
        %v2493 = vrot.slane %v2397, 2
        %v2494 = vsel %vm1379, %v2492, %v2493
        %v2495 = vrot.slane %v2398, 2
        %v2496 = vsel %vm1379, %v2493, %v2495
        %v2497 = vrot.slane %v2399, 2
        %v2498 = vrot.slane %v2400, 2
        %v2499 = vsel %vm1379, %v2497, %v2498
        %v2500 = vrot.slane %v2401, 2
        %v2501 = vsel %vm1379, %v2498, %v2500
        %v2502 = vrot.slane %v2402, 2
        %v2503 = vrot.slane %v2403, 2
        %v2504 = vsel %vm1379, %v2502, %v2503
        %v2505 = vrot.slane %v2404, 2
        %v2506 = vsel %vm1379, %v2503, %v2505
        %v2507 = vrot.slane %v2405, 2
        %v2508 = vrot.slane %v2406, 2
        %v2509 = vsel %vm1379, %v2507, %v2508
        %v2510 = vrot.slane %v2407, 2
        %v2511 = vsel %vm1379, %v2508, %v2510
        %v2512 = vrot.slane %v2408, 2
        %v2513 = vrot.slane %v2409, 2
        %v2514 = vsel %vm1379, %v2512, %v2513
        %v2515 = vrot.slane %v2410, 2
        %v2516 = vsel %vm1379, %v2513, %v2515
        %v2517 = vrot.slane %v2411, 2
        %v2518 = vrot.slane %v2412, 2
        %v2519 = vsel %vm1379, %v2517, %v2518
        %v2520 = vrot.slane %v2413, 2
        %v2521 = vsel %vm1379, %v2518, %v2520
        %v2522 = vrot.slane %v2414, 2
        %v2523 = vrot.slane %v2415, 2
        %v2524 = vsel %vm1379, %v2522, %v2523
        %v2525 = vrot.slane %v2416, 2
        %v2526 = vsel %vm1379, %v2523, %v2525
        %v2527 = vrot.slane %v2417, 2
        %v2528 = vrot.slane %v2418, 2
        %v2529 = vsel %vm1379, %v2527, %v2528
        %v2530 = vrot.slane %v2419, 2
        %v2531 = vsel %vm1379, %v2528, %v2530
        %v2532 = vrot.slane %v2420, 2
        %v2533 = vrot.slane %v2421, 2
        %v2534 = vsel %vm1379, %v2532, %v2533
        %v2535 = vrot.slane %v2422, 2
        %v2536 = vsel %vm1379, %v2533, %v2535
        %v2537 = vrot.slane %v2423, 2
        %v2538 = vrot.slane %v2424, 2
        %v2539 = vsel %vm1379, %v2537, %v2538
        %v2540 = vrot.slane %v2425, 2
        %v2541 = vsel %vm1379, %v2538, %v2540
        %v2542 = vrot.slane %v2426, 2
        %v2543 = vrot.slane %v2427, 2
        %v2544 = vsel %vm1379, %v2542, %v2543
        %v2545 = vrot.slane %v2428, 2
        %v2546 = vsel %vm1379, %v2543, %v2545
        %v2547 = vrot.slane %v2429, 2
        %v2548 = vrot.slane %v2430, 2
        %v2549 = vsel %vm1379, %v2547, %v2548
        %v2550 = vrot.slane %v2431, 2
        %v2551 = vsel %vm1379, %v2548, %v2550
        %v2552 = vrot.slane %v2432, 2
        %v2553 = vrot.slane %v2433, 2
        %v2554 = vsel %vm1379, %v2552, %v2553
        %v2555 = vrot.slane %v2434, 2
        %v2556 = vsel %vm1379, %v2553, %v2555
        %v2557 = vrot.slane %v2435, 2
        %v2558 = vrot.slane %v2436, 2
        %v2559 = vsel %vm1379, %v2557, %v2558
        %v2560 = vrot.slane %v2437, 2
        %v2561 = vsel %vm1379, %v2558, %v2560
        %v2562 = vrot.slane %v2438, 2
        %v2563 = vrot.slane %v2439, 2
        %v2564 = vsel %vm1379, %v2562, %v2563
        %v2565 = vrot.slane %v2440, 2
        %v2566 = vsel %vm1379, %v2563, %v2565
        %v2567 = vrot.slane %v2441, 2
        %v2568 = vrot.slane %v2442, 2
        %v2569 = vsel %vm1379, %v2567, %v2568
        %v2570 = vrot.slane %v2443, 2
        %v2571 = vsel %vm1379, %v2568, %v2570
        %v2604 = vadd.f32 %v2360, %v2494
        %v2605 = vadd.f32 %v2361, %v2496
        %v2606 = vadd.f32 %v2362, %v2499
        %v2607 = vadd.f32 %v2363, %v2501
        %v2608 = vadd.f32 %v2364, %v2504
        %v2609 = vadd.f32 %v2365, %v2506
        %v2610 = vadd.f32 %v2366, %v2509
        %v2611 = vadd.f32 %v2367, %v2511
        %v2612 = vadd.f32 %v2368, %v2514
        %v2613 = vadd.f32 %v2369, %v2516
        %v2614 = vadd.f32 %v2370, %v2519
        %v2615 = vadd.f32 %v2371, %v2521
        %v2616 = vadd.f32 %v2372, %v2524
        %v2617 = vadd.f32 %v2373, %v2526
        %v2618 = vadd.f32 %v2374, %v2529
        %v2619 = vadd.f32 %v2375, %v2531
        %v2620 = vadd.f32 %v2376, %v2534
        %v2621 = vadd.f32 %v2377, %v2536
        %v2622 = vadd.f32 %v2378, %v2539
        %v2623 = vadd.f32 %v2379, %v2541
        %v2624 = vadd.f32 %v2380, %v2544
        %v2625 = vadd.f32 %v2381, %v2546
        %v2626 = vadd.f32 %v2382, %v2549
        %v2627 = vadd.f32 %v2383, %v2551
        %v2628 = vadd.f32 %v2384, %v2554
        %v2629 = vadd.f32 %v2385, %v2556
        %v2630 = vadd.f32 %v2386, %v2559
        %v2631 = vadd.f32 %v2387, %v2561
        %v2632 = vadd.f32 %v2388, %v2564
        %v2633 = vadd.f32 %v2389, %v2566
        %v2634 = vadd.f32 %v2390, %v2569
        %v2635 = vadd.f32 %v2391, %v2571
        %v2636 = vld [vmem:[%s5] sm:$0xff]
        %v2637 = vld [vmem:[%s6] sm:$0xff]
        %2639 = vset.pattern.permute.xlu0 0
        %2640 = vperm.xlu0 %2639, %v2637
        %v2641 = vpop.permute.xlu0 %2640
        %v2644 = vsel %vm321, %v2636, 0
        %v2647 = vsel %vm321, %v2604, 0
        %v2650 = vsel %vm321, %v2605, 0
        %v2653 = vsel %vm321, %v2606, 0
        %v2656 = vsel %vm321, %v2607, 0
        %v2659 = vsel %vm321, %v2608, 0
        %v2662 = vsel %vm321, %v2609, 0
        %v2665 = vsel %vm321, %v2610, 0
        %v2668 = vsel %vm321, %v2611, 0
        %v2671 = vsel %vm321, %v2612, 0
        %v2674 = vsel %vm321, %v2613, 0
        %v2677 = vsel %vm321, %v2614, 0
        %v2680 = vsel %vm321, %v2615, 0
        %v2683 = vsel %vm321, %v2616, 0
        %v2686 = vsel %vm321, %v2617, 0
        %v2689 = vsel %vm321, %v2618, 0
        %v2692 = vsel %vm321, %v2619, 0
        %v2695 = vsel %vm321, %v2620, 0
        %v2698 = vsel %vm321, %v2621, 0
        %v2701 = vsel %vm321, %v2622, 0
        %v2704 = vsel %vm321, %v2623, 0
        %v2707 = vsel %vm321, %v2624, 0
        %v2710 = vsel %vm321, %v2625, 0
        %v2713 = vsel %vm321, %v2626, 0
        %v2716 = vsel %vm321, %v2627, 0
        %v2719 = vsel %vm321, %v2628, 0
        %v2722 = vsel %vm321, %v2629, 0
        %v2725 = vsel %vm321, %v2630, 0
        %v2728 = vsel %vm321, %v2631, 0
        %v2731 = vsel %vm321, %v2632, 0
        %v2734 = vsel %vm321, %v2633, 0
        %v2737 = vsel %vm321, %v2634, 0
        %v2740 = vsel %vm321, %v2635, 0
        %2742 = vmatprep.subr.mxu0 0.0
        %2743 = vmatpush1.xpose.msra.mxu0 %v2647
        %2744 = vmatprep.subr.mxu0 0.0
        %2745 = vmatpush1.xpose.msra.mxu0 %v2650
        %2746 = vmatprep.subr.mxu0 0.0
        %2747 = vmatpush1.xpose.msra.mxu0 %v2653
        %2748 = vmatprep.subr.mxu0 0.0
        %2749 = vmatpush1.xpose.msra.mxu0 %v2656
        %2750 = vmatprep.subr.mxu0 0.0
        %2751 = vmatpush1.xpose.msra.mxu0 %v2659
        %2752 = vmatprep.subr.mxu0 0.0
        %2753 = vmatpush1.xpose.msra.mxu0 %v2662
        %2754 = vmatprep.subr.mxu0 0.0
        %2755 = vmatpush1.xpose.msra.mxu0 %v2665
        %2756 = vmatprep.subr.mxu0 0.0
        %2757 = vmatpush1.xpose.msra.mxu0 %v2668
        %2758 = vmatprep.subr.mxu0 0.0
        %2759 = vmatpush1.xpose.msra.mxu0 %v2671
        %2760 = vmatprep.subr.mxu0 0.0
        %2761 = vmatpush1.xpose.msra.mxu0 %v2674
        %2762 = vmatprep.subr.mxu0 0.0
        %2763 = vmatpush1.xpose.msra.mxu0 %v2677
        %2764 = vmatprep.subr.mxu0 0.0
        %2765 = vmatpush1.xpose.msra.mxu0 %v2680
        %2766 = vmatprep.subr.mxu0 0.0
        %2767 = vmatpush1.xpose.msra.mxu0 %v2683
        %2768 = vmatprep.subr.mxu0 0.0
        %2769 = vmatpush1.xpose.msra.mxu0 %v2686
        %2770 = vmatprep.subr.mxu0 0.0
        %2771 = vmatpush1.xpose.msra.mxu0 %v2689
        %2772 = vmatprep.subr.mxu0 0.0
        %2773 = vmatpush1.xpose.msra.mxu0 %v2692
        %2774 = vmatprep.subr.mxu0 0.0
        %2775 = vmatpush1.xpose.msra.mxu0 %v2695
        %2776 = vmatprep.subr.mxu0 0.0
        %2777 = vmatpush1.xpose.msra.mxu0 %v2698
        %2778 = vmatprep.subr.mxu0 0.0
        %2779 = vmatpush1.xpose.msra.mxu0 %v2701
        %2780 = vmatprep.subr.mxu0 0.0
        %2781 = vmatpush1.xpose.msra.mxu0 %v2704
        %2782 = vmatprep.subr.mxu0 0.0
        %2783 = vmatpush1.xpose.msra.mxu0 %v2707
        %2784 = vmatprep.subr.mxu0 0.0
        %2785 = vmatpush1.xpose.msra.mxu0 %v2710
        %2786 = vmatprep.subr.mxu0 0.0
        %2787 = vmatpush1.xpose.msra.mxu0 %v2713
        %2788 = vmatprep.subr.mxu0 0.0
        %2789 = vmatpush1.xpose.msra.mxu0 %v2716
        %2790 = vmatprep.subr.mxu0 0.0
        %2791 = vmatpush1.xpose.msra.mxu0 %v2719
        %2792 = vmatprep.subr.mxu0 0.0
        %2793 = vmatpush1.xpose.msra.mxu0 %v2722
        %2794 = vmatprep.subr.mxu0 0.0
        %2795 = vmatpush1.xpose.msra.mxu0 %v2725
        %2796 = vmatprep.subr.mxu0 0.0
        %2797 = vmatpush1.xpose.msra.mxu0 %v2728
        %2798 = vmatprep.subr.mxu0 0.0
        %2799 = vmatpush1.xpose.msra.mxu0 %v2731
        %2800 = vmatprep.subr.mxu0 0.0
        %2801 = vmatpush1.xpose.msra.mxu0 %v2734
        %2802 = vmatprep.subr.mxu0 0.0
        %2803 = vmatpush1.xpose.msra.mxu0 %v2737
        %2804 = vmatprep.subr.mxu0 0.0
        %2805 = vmatpush1.xpose.msra.mxu0 %v2740
        %2806 = vmatprep.mubr.f32.mxu0 0.0
        %2807 = vmatmul.mubr.f32.gmra.mrb[0].mxu0 %v2644
        %v2808 = vpop.f32.mrb[0].mxu0
        %v2809 = vadd.f32 %v2641, %v2808
        %v2810 = vpop.f32.mrb[0].mxu0
        %v2811 = vadd.f32 %v2641, %v2810
        %2812 = vdwg.mxu0
        %vm2813 = vcmp.ge.f32.partialorder %v2809, 0.0
        %vm2814 = vcmp.ge.f32.partialorder %v2811, 0.0
        %v2815 = vmul.f32 %v2809, 0.01
        %v2816 = vmul.f32 %v2811, 0.01
        %v2817 = vsel %vm2813, %v2809, %v2815
        %v2818 = vsel %vm2814, %v2811, %v2816
        %2819 = vst [vmem:[%s286] sm:$0xff] %v2817
        %2820 = vst [vmem:[%s286 + $0x8] sm:$0xff] %v2818
        %s2821 = sand.u32 %s186, 1
        %s2822 = scalar_lea.sflag [#allocation4], %s2821
        %s2823 = sand.u32 %s186, 1
        %s2824 = smul.addr %s2823, 16
        %s2825 = scalar_lea.vmem [#allocation3], %s2824
        // Predicated region
        $region49: #{tpu_custom_call.1} parent=47 // pred_check
          %p2826 = pneg %p196
        $region50: #{tpu_custom_call.1} parent=47 // pred_check_branch
          %2828 = sbr.rel (%p2826) target = $region52
        $region51: #{tpu_custom_call.1} parent=47 // pred_region
          %s2830 = ssub.s32 256, 256
          %2831 = vsyncadd %s2822, %s2830
          %s2832 = smul.addr %s21, 2
          %s2833 = smul.addr %s2832, 128
          %s2834 = scalar_lea.hbm %s7, %s2833
          %s2836 = sshll.u32 %s2825, 4
          %s2837 = int_to_ptr.vmem [resolvable:$true] %s2836
          %2839 = dma.vmem_to_hbm [thread:$0]  %s2837, 256, %s2834, %s2822
        $region52: #{tpu_custom_call.1} parent=47 // pred_fallthru
          _
      $region48: #{tpu_custom_call.1} parent=5 // pred_fallthru
        _
      %p2840 = scmp.le.s32.totalorder 2, %s16
      // Predicated region
      $region53: #{tpu_custom_call.1} parent=5 // pred_check
        %p2841 = pneg %p2840
      $region54: #{tpu_custom_call.1} parent=5 // pred_check_branch
        %2843 = sbr.rel (%p2841) target = $region56
      $region55: #{tpu_custom_call.1} parent=5 // pred_region
        %s2844 = ssub.s32 %s16, 2
        // Predicated region
        $region57: #{tpu_custom_call.1} parent=55 // pred_check
          %p2845 = pneg %p202
        $region58: #{tpu_custom_call.1} parent=55 // pred_check_branch
          %2847 = sbr.rel (%p2845) target = $region60
        $region59: #{tpu_custom_call.1} parent=55 // pred_region
          %s2848 = sand.u32 %s187, 1
          %s2849 = scalar_lea.sflag [#allocation4], %s2848
          %s2850 = sand.u32 %s187, 1
          %s2851 = smul.addr %s2850, 16
          %s2852 = scalar_lea.vmem [#allocation3], %s2851
          %2853 = dma.done %s2849, 256
        $region60: #{tpu_custom_call.1} parent=55 // pred_fallthru
          _
      $region56: #{tpu_custom_call.1} parent=5 // pred_fallthru
        _
    $region6: #{tpu_custom_call.1} parent=1 // loop_footer
      %s20 = sadd.s32 1, %s16
    $region7: #{tpu_custom_call.1} parent=1 // loop_footer_branch
      %15 = sbr.rel target = $region3
    $region8: #{tpu_custom_call.1} parent=1 // loop_exit
      _
    %2854 = vsyncpa [#allocation4], 1
    %s2855 = scalar_lea.sflag [#allocation4], 1
    %2856 = vsyncpa %s2855, 1

</llo_original>
